<compile_context>
chip_gen: v6e
topology: v6e:2x2x1
jax: 0.10.0
libtpu: 0.0.40
codegen_flags: <defaults>
</compile_context>

<pallas_src>
import functools

import jax
import jax.numpy as jnp
from jax import lax
from jax.experimental import pallas as pl
from jax.experimental.pallas import tpu as pltpu


def _lstm_fc_kernel(x_ref,                       # (T*Bp, I)
                    wih0_ref, whh0_ref, b0_ref,  # (I,4H), (H,4H), (1,4H)
                    wih1_ref, whh1_ref, b1_ref,  # (H,4H), (H,4H), (1,4H)
                    wfc_ref, bfc_ref,            # (H,On), (1,On) lane-padded
                    out_ref,                     # (Bp, On)
                    gates_s,                     # (T*Bp, 4H) scratch
                    *, T, Bp):
    H = whh0_ref.shape[0]
    H4 = 4 * H

    # ---- layer 0: one big input-side matmul for ALL timesteps ----
    # Default MXU precision is fine at K=16/32 for the 1e-4 tolerance; switch
    # to precision=lax.Precision.HIGHEST if H or the tolerance grows.
    gates_s[...] = (jnp.dot(x_ref[...], wih0_ref[...],
                            preferred_element_type=jnp.float32)
                    + b0_ref[...])

    # ---- hoisted loop invariants (built once, reused across the unroll) ----
    whh0 = whh0_ref[...]
    wih1 = wih1_ref[...]
    whh1 = whh1_ref[...]
    b1 = jnp.broadcast_to(b1_ref[...], (Bp, H4))

    # Per-lane constants for the single-tanh activation trick:
    #   i/f/o lanes: pre-scale 0.5, post: 0.5*tanh + 0.5  (== sigmoid)
    #   g lanes:     pre-scale 1.0, post: 1.0*tanh + 0.0  (== tanh)
    col = lax.broadcasted_iota(jnp.int32, (Bp, H4), 1)
    is_g = (col >= 2 * H) & (col < 3 * H)
    pre = jnp.where(is_g, 1.0, 0.5).astype(jnp.float32)   # also the post scale
    off = jnp.where(is_g, 0.0, 0.5).astype(jnp.float32)

    def cell(g, c):
        a = jnp.tanh(g * pre) * pre + off      # [sig(i), sig(f), tanh(g), sig(o)]
        i = a[:, 0 * H:1 * H]
        f = a[:, 1 * H:2 * H]
        gg = a[:, 2 * H:3 * H]
        o = a[:, 3 * H:4 * H]
        c_new = f * c + i * gg
        h_new = o * jnp.tanh(c_new)
        return h_new, c_new

    zeros = jnp.zeros((Bp, H), jnp.float32)
    h0, c0 = zeros, zeros
    h1, c1 = zeros, zeros

    # ---- wavefront: layer-0 step t overlaps layer-1 step t-1 ----
    # TODO(synk): inter-layer dropout (p=0.2) is a no-op in eval mode; skipped.
    for t in range(T):                          # static unroll (T is const)
        h0_prev = h0
        g0 = gates_s[t * Bp:(t + 1) * Bp, :] + jnp.dot(
            h0_prev, whh0, preferred_element_type=jnp.float32)
        h0, c0 = cell(g0, c0)
        if t > 0:
            # layer-1 step t-1: both dots depend only on h0_prev / h1 (already
            # available at step start), so they overlap the layer-0 dot above.
            g1 = (jnp.dot(h0_prev, wih1, preferred_element_type=jnp.float32)
                  + jnp.dot(h1, whh1, preferred_element_type=jnp.float32)
                  + b1)
            h1, c1 = cell(g1, c1)

    # ---- drain: final layer-1 step consumes h0_{T-1} ----
    g1 = (jnp.dot(h0, wih1, preferred_element_type=jnp.float32)
          + jnp.dot(h1, whh1, preferred_element_type=jnp.float32)
          + b1)
    h1, c1 = cell(g1, c1)

    # ---- fc head on the last hidden state; lane-dense (Bp, On) store ----
    out_ref[...] = (jnp.dot(h1, wfc_ref[...],
                            preferred_element_type=jnp.float32)
                    + bfc_ref[...]).astype(out_ref.dtype)


def _forward_impl(x, params):
    """x: (B, T, I) float32, batch_first like PyTorch. Returns (B, O)."""
    B, T, I = x.shape
    H = params["whh0_t"].shape[0]             # whh0_t is (H, 4H)
    O = params["wfc_t"].shape[1]
    Bp = ((B + 7) // 8) * 8                   # pad batch to sublane multiple
    On = ((O + 127) // 128) * 128             # lane-dense output width

    x_tm = jnp.transpose(x, (1, 0, 2))        # time-major (T, B, I)
    x_tm = jnp.pad(x_tm, ((0, 0), (0, Bp - B), (0, 0)))
    x2d = x_tm.reshape(T * Bp, I)             # (T*Bp, I) flat slab

    wfc_p = jnp.pad(params["wfc_t"], ((0, 0), (0, On - O)))   # (H, On)
    bfc_p = jnp.pad(params["bfc"], ((0, 0), (0, On - O)))     # (1, On)

    vmem = pl.BlockSpec(memory_space=pltpu.MemorySpace.VMEM)
    kernel = functools.partial(_lstm_fc_kernel, T=T, Bp=Bp)

    out = pl.pallas_call(
        kernel,
        out_shape=jax.ShapeDtypeStruct((Bp, On), jnp.float32),
        in_specs=[vmem] * 9,
        out_specs=vmem,
        scratch_shapes=[
            pltpu.VMEM((T * Bp, 4 * H), jnp.float32),  # precomputed l0 gates
        ],
    )(
        x2d,
        params["wih0_t"], params["whh0_t"], params["b0"],
        params["wih1_t"], params["whh1_t"], params["b1"],
        wfc_p, bfc_p,
    )
    return out[:B, :O]


# One fused dispatch: transpose + pad + pallas_call + slice all under jit.
lstm_model_forward = jax.jit(_forward_impl)


def init_params(key, input_size, hidden_size, output_size):
    """Deterministic init mimicking PyTorch's U(-1/sqrt(H), 1/sqrt(H))."""
    H = hidden_size
    k = 1.0 / jnp.sqrt(jnp.float32(H))
    keys = jax.random.split(key, 12)

    def u(kk, shape):
        return jax.random.uniform(kk, shape, jnp.float32, -k, k)

    # PyTorch shapes: weight_ih_l0 (4H, I), weight_hh_l0 (4H, H), biases (4H,)
    wih0 = u(keys[0], (4 * H, input_size))
    whh0 = u(keys[1], (4 * H, H))
    bih0 = u(keys[2], (4 * H,))
    bhh0 = u(keys[3], (4 * H,))
    wih1 = u(keys[4], (4 * H, H))
    whh1 = u(keys[5], (4 * H, H))
    bih1 = u(keys[6], (4 * H,))
    bhh1 = u(keys[7], (4 * H,))
    # fc: weight (O, H), bias (O,)
    wfc = jax.random.uniform(keys[8], (output_size, H), jnp.float32, -k, k)
    bfc = jax.random.uniform(keys[9], (output_size,), jnp.float32, -k, k)

    return {
        "wih0": wih0, "whh0": whh0,
        "wih0_t": wih0.T, "whh0_t": whh0.T,
        "b0": (bih0 + bhh0).reshape(1, 4 * H),
        "wih1": wih1, "whh1": whh1,
        "wih1_t": wih1.T, "whh1_t": whh1.T,
        "b1": (bih1 + bhh1).reshape(1, 4 * H),
        "wfc": wfc, "wfc_t": wfc.T,
        "bfc": bfc.reshape(1, output_size),
    }


def reference_forward(x, params):
    """Pure-JAX reference of the PyTorch LSTMModel.forward (eval mode)."""
    B, T, I = x.shape
    H = params["whh0"].shape[0] // 4

    def run_layer(seq, wih, whh, b):
        h = jnp.zeros((B, H), jnp.float32)
        c = jnp.zeros((B, H), jnp.float32)

        def step(carry, x_t):
            h, c = carry
            gates = x_t @ wih.T + h @ whh.T + b
            i = jax.nn.sigmoid(gates[:, 0 * H:1 * H])
            f = jax.nn.sigmoid(gates[:, 1 * H:2 * H])
            g = jnp.tanh(gates[:, 2 * H:3 * H])
            o = jax.nn.sigmoid(gates[:, 3 * H:4 * H])
            c = f * c + i * g
            h = o * jnp.tanh(c)
            return (h, c), h

        (_, _), hs = lax.scan(step, (h, c), jnp.transpose(seq, (1, 0, 2)))
        return jnp.transpose(hs, (1, 0, 2))

    h1 = run_layer(x, params["wih0"], params["whh0"], params["b0"][0])
    h2 = run_layer(h1, params["wih1"], params["whh1"], params["b1"][0])
    return h2[:, -1, :] @ params["wfc"].T + params["bfc"][0]


if __name__ == "__main__":
    B, T, INPUT, HIDDEN, OUT = 2, 8, 16, 32, 1

    key = jax.random.PRNGKey(0)
    kx, kp = jax.random.split(key)
    x = jax.random.normal(kx, (B, T, INPUT), jnp.float32)
    params = init_params(kp, INPUT, HIDDEN, OUT)

    out = jax.block_until_ready(lstm_model_forward(x, params))

    ref = reference_forward(x, params)
    assert out.shape == (B, OUT)
    assert jnp.allclose(out, ref, atol=1e-4, rtol=1e-4), (out, ref)

    print("KERNEL_OK")
</pallas_src>

<mosaic_0001>
module attributes {stable_mosaic.version = 11 : i64} {
  func.func @_lstm_fc_kernel(%arg0: memref<64x16xf32, #tpu.memory_space<vmem>>, %arg1: memref<16x128xf32, #tpu.memory_space<vmem>>, %arg2: memref<32x128xf32, #tpu.memory_space<vmem>>, %arg3: memref<1x128xf32, #tpu.memory_space<vmem>>, %arg4: memref<32x128xf32, #tpu.memory_space<vmem>>, %arg5: memref<32x128xf32, #tpu.memory_space<vmem>>, %arg6: memref<1x128xf32, #tpu.memory_space<vmem>>, %arg7: memref<32x128xf32, #tpu.memory_space<vmem>>, %arg8: memref<1x128xf32, #tpu.memory_space<vmem>>, %arg9: memref<8x128xf32, #tpu.memory_space<vmem>>, %arg10: memref<64x128xf32, #tpu.memory_space<vmem>>) attributes {dimension_semantics = [], scalar_prefetch = 0 : i64, scratch_operands = 1 : i64, tpu.core_type = #tpu.core_type<tc>} {
    %c0 = arith.constant 0 : index
    %c0_0 = arith.constant 0 : index
    %0 = vector.load %arg0[%c0, %c0_0] : memref<64x16xf32, #tpu.memory_space<vmem>>, vector<64x16xf32>
    %c0_1 = arith.constant 0 : index
    %c0_2 = arith.constant 0 : index
    %1 = vector.load %arg1[%c0_1, %c0_2] : memref<16x128xf32, #tpu.memory_space<vmem>>, vector<16x128xf32>
    %cst = arith.constant dense<0.000000e+00> : vector<64x128xf32>
    %2 = tpu.matmul %0, %1, %cst {dimension_numbers = #tpu.dot_dimension_numbers<[1], [0], [0], [1], [0, 0, 1, 1], [], []>} : vector<64x16xf32>, vector<16x128xf32>, vector<64x128xf32> -> vector<64x128xf32>
    %c0_3 = arith.constant 0 : index
    %c0_4 = arith.constant 0 : index
    %3 = vector.load %arg3[%c0_3, %c0_4] : memref<1x128xf32, #tpu.memory_space<vmem>>, vector<1x128xf32>
    %4 = vector.broadcast %3 : vector<1x128xf32> to vector<64x128xf32>
    %5 = arith.addf %2, %4 : vector<64x128xf32>
    %c0_5 = arith.constant 0 : index
    %c0_6 = arith.constant 0 : index
    %6 = vector.load %arg10[%c0_5, %c0_6] : memref<64x128xf32, #tpu.memory_space<vmem>>, vector<64x128xf32>
    tpu.vector_store %arg10[%c0_5, %c0_6], %5 {strides = array<i32>} : memref<64x128xf32, #tpu.memory_space<vmem>>, vector<64x128xf32>,
    %c0_7 = arith.constant 0 : index
    %c0_8 = arith.constant 0 : index
    %7 = vector.load %arg2[%c0_7, %c0_8] : memref<32x128xf32, #tpu.memory_space<vmem>>, vector<32x128xf32>
    %c0_9 = arith.constant 0 : index
    %c0_10 = arith.constant 0 : index
    %8 = vector.load %arg4[%c0_9, %c0_10] : memref<32x128xf32, #tpu.memory_space<vmem>>, vector<32x128xf32>
    %c0_11 = arith.constant 0 : index
    %c0_12 = arith.constant 0 : index
    %9 = vector.load %arg5[%c0_11, %c0_12] : memref<32x128xf32, #tpu.memory_space<vmem>>, vector<32x128xf32>
    %c0_13 = arith.constant 0 : index
    %c0_14 = arith.constant 0 : index
    %10 = vector.load %arg6[%c0_13, %c0_14] : memref<1x128xf32, #tpu.memory_space<vmem>>, vector<1x128xf32>
    %11 = vector.shape_cast %10 : vector<1x128xf32> to vector<1x128xf32>
    %12 = vector.broadcast %11 : vector<1x128xf32> to vector<8x128xf32>
    %13 = tpu.iota {dimensions = array<i32: 1>} : vector<8x128xi32>
    %c64_i32 = arith.constant 64 : i32
    %14 = vector.broadcast %c64_i32 : i32 to vector<8x128xi32>
    %15 = arith.cmpi sge, %13, %14 : vector<8x128xi32>
    %c96_i32 = arith.constant 96 : i32
    %16 = vector.broadcast %c96_i32 : i32 to vector<8x128xi32>
    %17 = arith.cmpi slt, %13, %16 : vector<8x128xi32>
    %18 = arith.andi %15, %17 : vector<8x128xi1>
    %cst_15 = arith.constant 1.000000e+00 : f32
    %cst_16 = arith.constant 5.000000e-01 : f32
    %19 = vector.broadcast %cst_15 : f32 to vector<8x128xf32>
    %20 = vector.broadcast %cst_16 : f32 to vector<8x128xf32>
    %21 = arith.select %18, %19, %20 : vector<8x128xi1>, vector<8x128xf32>
    %cst_17 = arith.constant 0.000000e+00 : f32
    %cst_18 = arith.constant 5.000000e-01 : f32
    %22 = vector.broadcast %cst_17 : f32 to vector<8x128xf32>
    %23 = vector.broadcast %cst_18 : f32 to vector<8x128xf32>
    %24 = arith.select %18, %22, %23 : vector<8x128xi1>, vector<8x128xf32>
    %cst_19 = arith.constant 0.000000e+00 : f32
    %25 = vector.broadcast %cst_19 : f32 to vector<8x32xf32>
    %c0_20 = arith.constant 0 : index
    %c0_21 = arith.constant 0 : index
    %26 = vector.load %arg10[%c0_20, %c0_21] : memref<64x128xf32, #tpu.memory_space<vmem>>, vector<8x128xf32>
    %cst_22 = arith.constant dense<0.000000e+00> : vector<8x128xf32>
    %27 = tpu.matmul %25, %7, %cst_22 {dimension_numbers = #tpu.dot_dimension_numbers<[1], [0], [0], [1], [0, 0, 1, 1], [], []>} : vector<8x32xf32>, vector<32x128xf32>, vector<8x128xf32> -> vector<8x128xf32>
    %28 = arith.addf %26, %27 : vector<8x128xf32>
    %29 = arith.mulf %28, %21 : vector<8x128xf32>
    %30 = math.tanh %29 : vector<8x128xf32>
    %31 = arith.mulf %30, %21 : vector<8x128xf32>
    %32 = arith.addf %31, %24 : vector<8x128xf32>
    %33 = vector.extract_strided_slice %32 {offsets = [0, 0], sizes = [8, 32], strides = [1, 1]} : vector<8x128xf32> to vector<8x32xf32>
    %34 = vector.extract_strided_slice %32 {offsets = [0, 32], sizes = [8, 32], strides = [1, 1]} : vector<8x128xf32> to vector<8x32xf32>
    %35 = vector.extract_strided_slice %32 {offsets = [0, 64], sizes = [8, 32], strides = [1, 1]} : vector<8x128xf32> to vector<8x32xf32>
    %36 = vector.extract_strided_slice %32 {offsets = [0, 96], sizes = [8, 32], strides = [1, 1]} : vector<8x128xf32> to vector<8x32xf32>
    %37 = arith.mulf %34, %25 : vector<8x32xf32>
    %38 = arith.mulf %33, %35 : vector<8x32xf32>
    %39 = arith.addf %37, %38 : vector<8x32xf32>
    %40 = math.tanh %39 : vector<8x32xf32>
    %41 = arith.mulf %36, %40 : vector<8x32xf32>
    %c8 = arith.constant 8 : index
    %c0_23 = arith.constant 0 : index
    %42 = vector.load %arg10[%c8, %c0_23] : memref<64x128xf32, #tpu.memory_space<vmem>>, vector<8x128xf32>
    %cst_24 = arith.constant dense<0.000000e+00> : vector<8x128xf32>
    %43 = tpu.matmul %41, %7, %cst_24 {dimension_numbers = #tpu.dot_dimension_numbers<[1], [0], [0], [1], [0, 0, 1, 1], [], []>} : vector<8x32xf32>, vector<32x128xf32>, vector<8x128xf32> -> vector<8x128xf32>
    %44 = arith.addf %42, %43 : vector<8x128xf32>
    %45 = arith.mulf %44, %21 : vector<8x128xf32>
    %46 = math.tanh %45 : vector<8x128xf32>
    %47 = arith.mulf %46, %21 : vector<8x128xf32>
    %48 = arith.addf %47, %24 : vector<8x128xf32>
    %49 = vector.extract_strided_slice %48 {offsets = [0, 0], sizes = [8, 32], strides = [1, 1]} : vector<8x128xf32> to vector<8x32xf32>
    %50 = vector.extract_strided_slice %48 {offsets = [0, 32], sizes = [8, 32], strides = [1, 1]} : vector<8x128xf32> to vector<8x32xf32>
    %51 = vector.extract_strided_slice %48 {offsets = [0, 64], sizes = [8, 32], strides = [1, 1]} : vector<8x128xf32> to vector<8x32xf32>
    %52 = vector.extract_strided_slice %48 {offsets = [0, 96], sizes = [8, 32], strides = [1, 1]} : vector<8x128xf32> to vector<8x32xf32>
    %53 = arith.mulf %50, %39 : vector<8x32xf32>
    %54 = arith.mulf %49, %51 : vector<8x32xf32>
    %55 = arith.addf %53, %54 : vector<8x32xf32>
    %56 = math.tanh %55 : vector<8x32xf32>
    %57 = arith.mulf %52, %56 : vector<8x32xf32>
    %cst_25 = arith.constant dense<0.000000e+00> : vector<8x128xf32>
    %58 = tpu.matmul %41, %8, %cst_25 {dimension_numbers = #tpu.dot_dimension_numbers<[1], [0], [0], [1], [0, 0, 1, 1], [], []>} : vector<8x32xf32>, vector<32x128xf32>, vector<8x128xf32> -> vector<8x128xf32>
    %cst_26 = arith.constant dense<0.000000e+00> : vector<8x128xf32>
    %59 = tpu.matmul %25, %9, %cst_26 {dimension_numbers = #tpu.dot_dimension_numbers<[1], [0], [0], [1], [0, 0, 1, 1], [], []>} : vector<8x32xf32>, vector<32x128xf32>, vector<8x128xf32> -> vector<8x128xf32>
    %60 = arith.addf %58, %59 : vector<8x128xf32>
    %61 = arith.addf %60, %12 : vector<8x128xf32>
    %62 = arith.mulf %61, %21 : vector<8x128xf32>
    %63 = math.tanh %62 : vector<8x128xf32>
    %64 = arith.mulf %63, %21 : vector<8x128xf32>
    %65 = arith.addf %64, %24 : vector<8x128xf32>
    %66 = vector.extract_strided_slice %65 {offsets = [0, 0], sizes = [8, 32], strides = [1, 1]} : vector<8x128xf32> to vector<8x32xf32>
    %67 = vector.extract_strided_slice %65 {offsets = [0, 32], sizes = [8, 32], strides = [1, 1]} : vector<8x128xf32> to vector<8x32xf32>
    %68 = vector.extract_strided_slice %65 {offsets = [0, 64], sizes = [8, 32], strides = [1, 1]} : vector<8x128xf32> to vector<8x32xf32>
    %69 = vector.extract_strided_slice %65 {offsets = [0, 96], sizes = [8, 32], strides = [1, 1]} : vector<8x128xf32> to vector<8x32xf32>
    %70 = arith.mulf %67, %25 : vector<8x32xf32>
    %71 = arith.mulf %66, %68 : vector<8x32xf32>
    %72 = arith.addf %70, %71 : vector<8x32xf32>
    %73 = math.tanh %72 : vector<8x32xf32>
    %74 = arith.mulf %69, %73 : vector<8x32xf32>
    %c16 = arith.constant 16 : index
    %c0_27 = arith.constant 0 : index
    %75 = vector.load %arg10[%c16, %c0_27] : memref<64x128xf32, #tpu.memory_space<vmem>>, vector<8x128xf32>
    %cst_28 = arith.constant dense<0.000000e+00> : vector<8x128xf32>
    %76 = tpu.matmul %57, %7, %cst_28 {dimension_numbers = #tpu.dot_dimension_numbers<[1], [0], [0], [1], [0, 0, 1, 1], [], []>} : vector<8x32xf32>, vector<32x128xf32>, vector<8x128xf32> -> vector<8x128xf32>
    %77 = arith.addf %75, %76 : vector<8x128xf32>
    %78 = arith.mulf %77, %21 : vector<8x128xf32>
    %79 = math.tanh %78 : vector<8x128xf32>
    %80 = arith.mulf %79, %21 : vector<8x128xf32>
    %81 = arith.addf %80, %24 : vector<8x128xf32>
    %82 = vector.extract_strided_slice %81 {offsets = [0, 0], sizes = [8, 32], strides = [1, 1]} : vector<8x128xf32> to vector<8x32xf32>
    %83 = vector.extract_strided_slice %81 {offsets = [0, 32], sizes = [8, 32], strides = [1, 1]} : vector<8x128xf32> to vector<8x32xf32>
    %84 = vector.extract_strided_slice %81 {offsets = [0, 64], sizes = [8, 32], strides = [1, 1]} : vector<8x128xf32> to vector<8x32xf32>
    %85 = vector.extract_strided_slice %81 {offsets = [0, 96], sizes = [8, 32], strides = [1, 1]} : vector<8x128xf32> to vector<8x32xf32>
    %86 = arith.mulf %83, %55 : vector<8x32xf32>
    %87 = arith.mulf %82, %84 : vector<8x32xf32>
    %88 = arith.addf %86, %87 : vector<8x32xf32>
    %89 = math.tanh %88 : vector<8x32xf32>
    %90 = arith.mulf %85, %89 : vector<8x32xf32>
    %cst_29 = arith.constant dense<0.000000e+00> : vector<8x128xf32>
    %91 = tpu.matmul %57, %8, %cst_29 {dimension_numbers = #tpu.dot_dimension_numbers<[1], [0], [0], [1], [0, 0, 1, 1], [], []>} : vector<8x32xf32>, vector<32x128xf32>, vector<8x128xf32> -> vector<8x128xf32>
    %cst_30 = arith.constant dense<0.000000e+00> : vector<8x128xf32>
    %92 = tpu.matmul %74, %9, %cst_30 {dimension_numbers = #tpu.dot_dimension_numbers<[1], [0], [0], [1], [0, 0, 1, 1], [], []>} : vector<8x32xf32>, vector<32x128xf32>, vector<8x128xf32> -> vector<8x128xf32>
    %93 = arith.addf %91, %92 : vector<8x128xf32>
    %94 = arith.addf %93, %12 : vector<8x128xf32>
    %95 = arith.mulf %94, %21 : vector<8x128xf32>
    %96 = math.tanh %95 : vector<8x128xf32>
    %97 = arith.mulf %96, %21 : vector<8x128xf32>
    %98 = arith.addf %97, %24 : vector<8x128xf32>
    %99 = vector.extract_strided_slice %98 {offsets = [0, 0], sizes = [8, 32], strides = [1, 1]} : vector<8x128xf32> to vector<8x32xf32>
    %100 = vector.extract_strided_slice %98 {offsets = [0, 32], sizes = [8, 32], strides = [1, 1]} : vector<8x128xf32> to vector<8x32xf32>
    %101 = vector.extract_strided_slice %98 {offsets = [0, 64], sizes = [8, 32], strides = [1, 1]} : vector<8x128xf32> to vector<8x32xf32>
    %102 = vector.extract_strided_slice %98 {offsets = [0, 96], sizes = [8, 32], strides = [1, 1]} : vector<8x128xf32> to vector<8x32xf32>
    %103 = arith.mulf %100, %72 : vector<8x32xf32>
    %104 = arith.mulf %99, %101 : vector<8x32xf32>
    %105 = arith.addf %103, %104 : vector<8x32xf32>
    %106 = math.tanh %105 : vector<8x32xf32>
    %107 = arith.mulf %102, %106 : vector<8x32xf32>
    %c24 = arith.constant 24 : index
    %c0_31 = arith.constant 0 : index
    %108 = vector.load %arg10[%c24, %c0_31] : memref<64x128xf32, #tpu.memory_space<vmem>>, vector<8x128xf32>
    %cst_32 = arith.constant dense<0.000000e+00> : vector<8x128xf32>
    %109 = tpu.matmul %90, %7, %cst_32 {dimension_numbers = #tpu.dot_dimension_numbers<[1], [0], [0], [1], [0, 0, 1, 1], [], []>} : vector<8x32xf32>, vector<32x128xf32>, vector<8x128xf32> -> vector<8x128xf32>
    %110 = arith.addf %108, %109 : vector<8x128xf32>
    %111 = arith.mulf %110, %21 : vector<8x128xf32>
    %112 = math.tanh %111 : vector<8x128xf32>
    %113 = arith.mulf %112, %21 : vector<8x128xf32>
    %114 = arith.addf %113, %24 : vector<8x128xf32>
    %115 = vector.extract_strided_slice %114 {offsets = [0, 0], sizes = [8, 32], strides = [1, 1]} : vector<8x128xf32> to vector<8x32xf32>
    %116 = vector.extract_strided_slice %114 {offsets = [0, 32], sizes = [8, 32], strides = [1, 1]} : vector<8x128xf32> to vector<8x32xf32>
    %117 = vector.extract_strided_slice %114 {offsets = [0, 64], sizes = [8, 32], strides = [1, 1]} : vector<8x128xf32> to vector<8x32xf32>
    %118 = vector.extract_strided_slice %114 {offsets = [0, 96], sizes = [8, 32], strides = [1, 1]} : vector<8x128xf32> to vector<8x32xf32>
    %119 = arith.mulf %116, %88 : vector<8x32xf32>
    %120 = arith.mulf %115, %117 : vector<8x32xf32>
    %121 = arith.addf %119, %120 : vector<8x32xf32>
    %122 = math.tanh %121 : vector<8x32xf32>
    %123 = arith.mulf %118, %122 : vector<8x32xf32>
    %cst_33 = arith.constant dense<0.000000e+00> : vector<8x128xf32>
    %124 = tpu.matmul %90, %8, %cst_33 {dimension_numbers = #tpu.dot_dimension_numbers<[1], [0], [0], [1], [0, 0, 1, 1], [], []>} : vector<8x32xf32>, vector<32x128xf32>, vector<8x128xf32> -> vector<8x128xf32>
    %cst_34 = arith.constant dense<0.000000e+00> : vector<8x128xf32>
    %125 = tpu.matmul %107, %9, %cst_34 {dimension_numbers = #tpu.dot_dimension_numbers<[1], [0], [0], [1], [0, 0, 1, 1], [], []>} : vector<8x32xf32>, vector<32x128xf32>, vector<8x128xf32> -> vector<8x128xf32>
    %126 = arith.addf %124, %125 : vector<8x128xf32>
    %127 = arith.addf %126, %12 : vector<8x128xf32>
    %128 = arith.mulf %127, %21 : vector<8x128xf32>
    %129 = math.tanh %128 : vector<8x128xf32>
    %130 = arith.mulf %129, %21 : vector<8x128xf32>
    %131 = arith.addf %130, %24 : vector<8x128xf32>
    %132 = vector.extract_strided_slice %131 {offsets = [0, 0], sizes = [8, 32], strides = [1, 1]} : vector<8x128xf32> to vector<8x32xf32>
    %133 = vector.extract_strided_slice %131 {offsets = [0, 32], sizes = [8, 32], strides = [1, 1]} : vector<8x128xf32> to vector<8x32xf32>
    %134 = vector.extract_strided_slice %131 {offsets = [0, 64], sizes = [8, 32], strides = [1, 1]} : vector<8x128xf32> to vector<8x32xf32>
    %135 = vector.extract_strided_slice %131 {offsets = [0, 96], sizes = [8, 32], strides = [1, 1]} : vector<8x128xf32> to vector<8x32xf32>
    %136 = arith.mulf %133, %105 : vector<8x32xf32>
    %137 = arith.mulf %132, %134 : vector<8x32xf32>
    %138 = arith.addf %136, %137 : vector<8x32xf32>
    %139 = math.tanh %138 : vector<8x32xf32>
    %140 = arith.mulf %135, %139 : vector<8x32xf32>
    %c32 = arith.constant 32 : index
    %c0_35 = arith.constant 0 : index
    %141 = vector.load %arg10[%c32, %c0_35] : memref<64x128xf32, #tpu.memory_space<vmem>>, vector<8x128xf32>
    %cst_36 = arith.constant dense<0.000000e+00> : vector<8x128xf32>
    %142 = tpu.matmul %123, %7, %cst_36 {dimension_numbers = #tpu.dot_dimension_numbers<[1], [0], [0], [1], [0, 0, 1, 1], [], []>} : vector<8x32xf32>, vector<32x128xf32>, vector<8x128xf32> -> vector<8x128xf32>
    %143 = arith.addf %141, %142 : vector<8x128xf32>
    %144 = arith.mulf %143, %21 : vector<8x128xf32>
    %145 = math.tanh %144 : vector<8x128xf32>
    %146 = arith.mulf %145, %21 : vector<8x128xf32>
    %147 = arith.addf %146, %24 : vector<8x128xf32>
    %148 = vector.extract_strided_slice %147 {offsets = [0, 0], sizes = [8, 32], strides = [1, 1]} : vector<8x128xf32> to vector<8x32xf32>
    %149 = vector.extract_strided_slice %147 {offsets = [0, 32], sizes = [8, 32], strides = [1, 1]} : vector<8x128xf32> to vector<8x32xf32>
    %150 = vector.extract_strided_slice %147 {offsets = [0, 64], sizes = [8, 32], strides = [1, 1]} : vector<8x128xf32> to vector<8x32xf32>
    %151 = vector.extract_strided_slice %147 {offsets = [0, 96], sizes = [8, 32], strides = [1, 1]} : vector<8x128xf32> to vector<8x32xf32>
    %152 = arith.mulf %149, %121 : vector<8x32xf32>
    %153 = arith.mulf %148, %150 : vector<8x32xf32>
    %154 = arith.addf %152, %153 : vector<8x32xf32>
    %155 = math.tanh %154 : vector<8x32xf32>
    %156 = arith.mulf %151, %155 : vector<8x32xf32>
    %cst_37 = arith.constant dense<0.000000e+00> : vector<8x128xf32>
    %157 = tpu.matmul %123, %8, %cst_37 {dimension_numbers = #tpu.dot_dimension_numbers<[1], [0], [0], [1], [0, 0, 1, 1], [], []>} : vector<8x32xf32>, vector<32x128xf32>, vector<8x128xf32> -> vector<8x128xf32>
    %cst_38 = arith.constant dense<0.000000e+00> : vector<8x128xf32>
    %158 = tpu.matmul %140, %9, %cst_38 {dimension_numbers = #tpu.dot_dimension_numbers<[1], [0], [0], [1], [0, 0, 1, 1], [], []>} : vector<8x32xf32>, vector<32x128xf32>, vector<8x128xf32> -> vector<8x128xf32>
    %159 = arith.addf %157, %158 : vector<8x128xf32>
    %160 = arith.addf %159, %12 : vector<8x128xf32>
    %161 = arith.mulf %160, %21 : vector<8x128xf32>
    %162 = math.tanh %161 : vector<8x128xf32>
    %163 = arith.mulf %162, %21 : vector<8x128xf32>
    %164 = arith.addf %163, %24 : vector<8x128xf32>
    %165 = vector.extract_strided_slice %164 {offsets = [0, 0], sizes = [8, 32], strides = [1, 1]} : vector<8x128xf32> to vector<8x32xf32>
    %166 = vector.extract_strided_slice %164 {offsets = [0, 32], sizes = [8, 32], strides = [1, 1]} : vector<8x128xf32> to vector<8x32xf32>
    %167 = vector.extract_strided_slice %164 {offsets = [0, 64], sizes = [8, 32], strides = [1, 1]} : vector<8x128xf32> to vector<8x32xf32>
    %168 = vector.extract_strided_slice %164 {offsets = [0, 96], sizes = [8, 32], strides = [1, 1]} : vector<8x128xf32> to vector<8x32xf32>
    %169 = arith.mulf %166, %138 : vector<8x32xf32>
    %170 = arith.mulf %165, %167 : vector<8x32xf32>
    %171 = arith.addf %169, %170 : vector<8x32xf32>
    %172 = math.tanh %171 : vector<8x32xf32>
    %173 = arith.mulf %168, %172 : vector<8x32xf32>
    %c40 = arith.constant 40 : index
    %c0_39 = arith.constant 0 : index
    %174 = vector.load %arg10[%c40, %c0_39] : memref<64x128xf32, #tpu.memory_space<vmem>>, vector<8x128xf32>
    %cst_40 = arith.constant dense<0.000000e+00> : vector<8x128xf32>
    %175 = tpu.matmul %156, %7, %cst_40 {dimension_numbers = #tpu.dot_dimension_numbers<[1], [0], [0], [1], [0, 0, 1, 1], [], []>} : vector<8x32xf32>, vector<32x128xf32>, vector<8x128xf32> -> vector<8x128xf32>
    %176 = arith.addf %174, %175 : vector<8x128xf32>
    %177 = arith.mulf %176, %21 : vector<8x128xf32>
    %178 = math.tanh %177 : vector<8x128xf32>
    %179 = arith.mulf %178, %21 : vector<8x128xf32>
    %180 = arith.addf %179, %24 : vector<8x128xf32>
    %181 = vector.extract_strided_slice %180 {offsets = [0, 0], sizes = [8, 32], strides = [1, 1]} : vector<8x128xf32> to vector<8x32xf32>
    %182 = vector.extract_strided_slice %180 {offsets = [0, 32], sizes = [8, 32], strides = [1, 1]} : vector<8x128xf32> to vector<8x32xf32>
    %183 = vector.extract_strided_slice %180 {offsets = [0, 64], sizes = [8, 32], strides = [1, 1]} : vector<8x128xf32> to vector<8x32xf32>
    %184 = vector.extract_strided_slice %180 {offsets = [0, 96], sizes = [8, 32], strides = [1, 1]} : vector<8x128xf32> to vector<8x32xf32>
    %185 = arith.mulf %182, %154 : vector<8x32xf32>
    %186 = arith.mulf %181, %183 : vector<8x32xf32>
    %187 = arith.addf %185, %186 : vector<8x32xf32>
    %188 = math.tanh %187 : vector<8x32xf32>
    %189 = arith.mulf %184, %188 : vector<8x32xf32>
    %cst_41 = arith.constant dense<0.000000e+00> : vector<8x128xf32>
    %190 = tpu.matmul %156, %8, %cst_41 {dimension_numbers = #tpu.dot_dimension_numbers<[1], [0], [0], [1], [0, 0, 1, 1], [], []>} : vector<8x32xf32>, vector<32x128xf32>, vector<8x128xf32> -> vector<8x128xf32>
    %cst_42 = arith.constant dense<0.000000e+00> : vector<8x128xf32>
    %191 = tpu.matmul %173, %9, %cst_42 {dimension_numbers = #tpu.dot_dimension_numbers<[1], [0], [0], [1], [0, 0, 1, 1], [], []>} : vector<8x32xf32>, vector<32x128xf32>, vector<8x128xf32> -> vector<8x128xf32>
    %192 = arith.addf %190, %191 : vector<8x128xf32>
    %193 = arith.addf %192, %12 : vector<8x128xf32>
    %194 = arith.mulf %193, %21 : vector<8x128xf32>
    %195 = math.tanh %194 : vector<8x128xf32>
    %196 = arith.mulf %195, %21 : vector<8x128xf32>
    %197 = arith.addf %196, %24 : vector<8x128xf32>
    %198 = vector.extract_strided_slice %197 {offsets = [0, 0], sizes = [8, 32], strides = [1, 1]} : vector<8x128xf32> to vector<8x32xf32>
    %199 = vector.extract_strided_slice %197 {offsets = [0, 32], sizes = [8, 32], strides = [1, 1]} : vector<8x128xf32> to vector<8x32xf32>
    %200 = vector.extract_strided_slice %197 {offsets = [0, 64], sizes = [8, 32], strides = [1, 1]} : vector<8x128xf32> to vector<8x32xf32>
    %201 = vector.extract_strided_slice %197 {offsets = [0, 96], sizes = [8, 32], strides = [1, 1]} : vector<8x128xf32> to vector<8x32xf32>
    %202 = arith.mulf %199, %171 : vector<8x32xf32>
    %203 = arith.mulf %198, %200 : vector<8x32xf32>
    %204 = arith.addf %202, %203 : vector<8x32xf32>
    %205 = math.tanh %204 : vector<8x32xf32>
    %206 = arith.mulf %201, %205 : vector<8x32xf32>
    %c48 = arith.constant 48 : index
    %c0_43 = arith.constant 0 : index
    %207 = vector.load %arg10[%c48, %c0_43] : memref<64x128xf32, #tpu.memory_space<vmem>>, vector<8x128xf32>
    %cst_44 = arith.constant dense<0.000000e+00> : vector<8x128xf32>
    %208 = tpu.matmul %189, %7, %cst_44 {dimension_numbers = #tpu.dot_dimension_numbers<[1], [0], [0], [1], [0, 0, 1, 1], [], []>} : vector<8x32xf32>, vector<32x128xf32>, vector<8x128xf32> -> vector<8x128xf32>
    %209 = arith.addf %207, %208 : vector<8x128xf32>
    %210 = arith.mulf %209, %21 : vector<8x128xf32>
    %211 = math.tanh %210 : vector<8x128xf32>
    %212 = arith.mulf %211, %21 : vector<8x128xf32>
    %213 = arith.addf %212, %24 : vector<8x128xf32>
    %214 = vector.extract_strided_slice %213 {offsets = [0, 0], sizes = [8, 32], strides = [1, 1]} : vector<8x128xf32> to vector<8x32xf32>
    %215 = vector.extract_strided_slice %213 {offsets = [0, 32], sizes = [8, 32], strides = [1, 1]} : vector<8x128xf32> to vector<8x32xf32>
    %216 = vector.extract_strided_slice %213 {offsets = [0, 64], sizes = [8, 32], strides = [1, 1]} : vector<8x128xf32> to vector<8x32xf32>
    %217 = vector.extract_strided_slice %213 {offsets = [0, 96], sizes = [8, 32], strides = [1, 1]} : vector<8x128xf32> to vector<8x32xf32>
    %218 = arith.mulf %215, %187 : vector<8x32xf32>
    %219 = arith.mulf %214, %216 : vector<8x32xf32>
    %220 = arith.addf %218, %219 : vector<8x32xf32>
    %221 = math.tanh %220 : vector<8x32xf32>
    %222 = arith.mulf %217, %221 : vector<8x32xf32>
    %cst_45 = arith.constant dense<0.000000e+00> : vector<8x128xf32>
    %223 = tpu.matmul %189, %8, %cst_45 {dimension_numbers = #tpu.dot_dimension_numbers<[1], [0], [0], [1], [0, 0, 1, 1], [], []>} : vector<8x32xf32>, vector<32x128xf32>, vector<8x128xf32> -> vector<8x128xf32>
    %cst_46 = arith.constant dense<0.000000e+00> : vector<8x128xf32>
    %224 = tpu.matmul %206, %9, %cst_46 {dimension_numbers = #tpu.dot_dimension_numbers<[1], [0], [0], [1], [0, 0, 1, 1], [], []>} : vector<8x32xf32>, vector<32x128xf32>, vector<8x128xf32> -> vector<8x128xf32>
    %225 = arith.addf %223, %224 : vector<8x128xf32>
    %226 = arith.addf %225, %12 : vector<8x128xf32>
    %227 = arith.mulf %226, %21 : vector<8x128xf32>
    %228 = math.tanh %227 : vector<8x128xf32>
    %229 = arith.mulf %228, %21 : vector<8x128xf32>
    %230 = arith.addf %229, %24 : vector<8x128xf32>
    %231 = vector.extract_strided_slice %230 {offsets = [0, 0], sizes = [8, 32], strides = [1, 1]} : vector<8x128xf32> to vector<8x32xf32>
    %232 = vector.extract_strided_slice %230 {offsets = [0, 32], sizes = [8, 32], strides = [1, 1]} : vector<8x128xf32> to vector<8x32xf32>
    %233 = vector.extract_strided_slice %230 {offsets = [0, 64], sizes = [8, 32], strides = [1, 1]} : vector<8x128xf32> to vector<8x32xf32>
    %234 = vector.extract_strided_slice %230 {offsets = [0, 96], sizes = [8, 32], strides = [1, 1]} : vector<8x128xf32> to vector<8x32xf32>
    %235 = arith.mulf %232, %204 : vector<8x32xf32>
    %236 = arith.mulf %231, %233 : vector<8x32xf32>
    %237 = arith.addf %235, %236 : vector<8x32xf32>
    %238 = math.tanh %237 : vector<8x32xf32>
    %239 = arith.mulf %234, %238 : vector<8x32xf32>
    %c56 = arith.constant 56 : index
    %c0_47 = arith.constant 0 : index
    %240 = vector.load %arg10[%c56, %c0_47] : memref<64x128xf32, #tpu.memory_space<vmem>>, vector<8x128xf32>
    %cst_48 = arith.constant dense<0.000000e+00> : vector<8x128xf32>
    %241 = tpu.matmul %222, %7, %cst_48 {dimension_numbers = #tpu.dot_dimension_numbers<[1], [0], [0], [1], [0, 0, 1, 1], [], []>} : vector<8x32xf32>, vector<32x128xf32>, vector<8x128xf32> -> vector<8x128xf32>
    %242 = arith.addf %240, %241 : vector<8x128xf32>
    %243 = arith.mulf %242, %21 : vector<8x128xf32>
    %244 = math.tanh %243 : vector<8x128xf32>
    %245 = arith.mulf %244, %21 : vector<8x128xf32>
    %246 = arith.addf %245, %24 : vector<8x128xf32>
    %247 = vector.extract_strided_slice %246 {offsets = [0, 0], sizes = [8, 32], strides = [1, 1]} : vector<8x128xf32> to vector<8x32xf32>
    %248 = vector.extract_strided_slice %246 {offsets = [0, 32], sizes = [8, 32], strides = [1, 1]} : vector<8x128xf32> to vector<8x32xf32>
    %249 = vector.extract_strided_slice %246 {offsets = [0, 64], sizes = [8, 32], strides = [1, 1]} : vector<8x128xf32> to vector<8x32xf32>
    %250 = vector.extract_strided_slice %246 {offsets = [0, 96], sizes = [8, 32], strides = [1, 1]} : vector<8x128xf32> to vector<8x32xf32>
    %251 = arith.mulf %248, %220 : vector<8x32xf32>
    %252 = arith.mulf %247, %249 : vector<8x32xf32>
    %253 = arith.addf %251, %252 : vector<8x32xf32>
    %254 = math.tanh %253 : vector<8x32xf32>
    %255 = arith.mulf %250, %254 : vector<8x32xf32>
    %cst_49 = arith.constant dense<0.000000e+00> : vector<8x128xf32>
    %256 = tpu.matmul %222, %8, %cst_49 {dimension_numbers = #tpu.dot_dimension_numbers<[1], [0], [0], [1], [0, 0, 1, 1], [], []>} : vector<8x32xf32>, vector<32x128xf32>, vector<8x128xf32> -> vector<8x128xf32>
    %cst_50 = arith.constant dense<0.000000e+00> : vector<8x128xf32>
    %257 = tpu.matmul %239, %9, %cst_50 {dimension_numbers = #tpu.dot_dimension_numbers<[1], [0], [0], [1], [0, 0, 1, 1], [], []>} : vector<8x32xf32>, vector<32x128xf32>, vector<8x128xf32> -> vector<8x128xf32>
    %258 = arith.addf %256, %257 : vector<8x128xf32>
    %259 = arith.addf %258, %12 : vector<8x128xf32>
    %260 = arith.mulf %259, %21 : vector<8x128xf32>
    %261 = math.tanh %260 : vector<8x128xf32>
    %262 = arith.mulf %261, %21 : vector<8x128xf32>
    %263 = arith.addf %262, %24 : vector<8x128xf32>
    %264 = vector.extract_strided_slice %263 {offsets = [0, 0], sizes = [8, 32], strides = [1, 1]} : vector<8x128xf32> to vector<8x32xf32>
    %265 = vector.extract_strided_slice %263 {offsets = [0, 32], sizes = [8, 32], strides = [1, 1]} : vector<8x128xf32> to vector<8x32xf32>
    %266 = vector.extract_strided_slice %263 {offsets = [0, 64], sizes = [8, 32], strides = [1, 1]} : vector<8x128xf32> to vector<8x32xf32>
    %267 = vector.extract_strided_slice %263 {offsets = [0, 96], sizes = [8, 32], strides = [1, 1]} : vector<8x128xf32> to vector<8x32xf32>
    %268 = arith.mulf %265, %237 : vector<8x32xf32>
    %269 = arith.mulf %264, %266 : vector<8x32xf32>
    %270 = arith.addf %268, %269 : vector<8x32xf32>
    %271 = math.tanh %270 : vector<8x32xf32>
    %272 = arith.mulf %267, %271 : vector<8x32xf32>
    %cst_51 = arith.constant dense<0.000000e+00> : vector<8x128xf32>
    %273 = tpu.matmul %255, %8, %cst_51 {dimension_numbers = #tpu.dot_dimension_numbers<[1], [0], [0], [1], [0, 0, 1, 1], [], []>} : vector<8x32xf32>, vector<32x128xf32>, vector<8x128xf32> -> vector<8x128xf32>
    %cst_52 = arith.constant dense<0.000000e+00> : vector<8x128xf32>
    %274 = tpu.matmul %272, %9, %cst_52 {dimension_numbers = #tpu.dot_dimension_numbers<[1], [0], [0], [1], [0, 0, 1, 1], [], []>} : vector<8x32xf32>, vector<32x128xf32>, vector<8x128xf32> -> vector<8x128xf32>
    %275 = arith.addf %273, %274 : vector<8x128xf32>
    %276 = arith.addf %275, %12 : vector<8x128xf32>
    %277 = arith.mulf %276, %21 : vector<8x128xf32>
    %278 = math.tanh %277 : vector<8x128xf32>
    %279 = arith.mulf %278, %21 : vector<8x128xf32>
    %280 = arith.addf %279, %24 : vector<8x128xf32>
    %281 = vector.extract_strided_slice %280 {offsets = [0, 0], sizes = [8, 32], strides = [1, 1]} : vector<8x128xf32> to vector<8x32xf32>
    %282 = vector.extract_strided_slice %280 {offsets = [0, 32], sizes = [8, 32], strides = [1, 1]} : vector<8x128xf32> to vector<8x32xf32>
    %283 = vector.extract_strided_slice %280 {offsets = [0, 64], sizes = [8, 32], strides = [1, 1]} : vector<8x128xf32> to vector<8x32xf32>
    %284 = vector.extract_strided_slice %280 {offsets = [0, 96], sizes = [8, 32], strides = [1, 1]} : vector<8x128xf32> to vector<8x32xf32>
    %285 = arith.mulf %282, %270 : vector<8x32xf32>
    %286 = arith.mulf %281, %283 : vector<8x32xf32>
    %287 = arith.addf %285, %286 : vector<8x32xf32>
    %288 = math.tanh %287 : vector<8x32xf32>
    %289 = arith.mulf %284, %288 : vector<8x32xf32>
    %c0_53 = arith.constant 0 : index
    %c0_54 = arith.constant 0 : index
    %290 = vector.load %arg7[%c0_53, %c0_54] : memref<32x128xf32, #tpu.memory_space<vmem>>, vector<32x128xf32>
    %cst_55 = arith.constant dense<0.000000e+00> : vector<8x128xf32>
    %291 = tpu.matmul %289, %290, %cst_55 {dimension_numbers = #tpu.dot_dimension_numbers<[1], [0], [0], [1], [0, 0, 1, 1], [], []>} : vector<8x32xf32>, vector<32x128xf32>, vector<8x128xf32> -> vector<8x128xf32>
    %c0_56 = arith.constant 0 : index
    %c0_57 = arith.constant 0 : index
    %292 = vector.load %arg8[%c0_56, %c0_57] : memref<1x128xf32, #tpu.memory_space<vmem>>, vector<1x128xf32>
    %293 = vector.broadcast %292 : vector<1x128xf32> to vector<8x128xf32>
    %294 = arith.addf %291, %293 : vector<8x128xf32>
    %c0_58 = arith.constant 0 : index
    %c0_59 = arith.constant 0 : index
    %295 = vector.load %arg9[%c0_58, %c0_59] : memref<8x128xf32, #tpu.memory_space<vmem>>, vector<8x128xf32>
    tpu.vector_store %arg9[%c0_58, %c0_59], %294 {strides = array<i32>} : memref<8x128xf32, #tpu.memory_space<vmem>>, vector<8x128xf32>,
    return
  }
}

</mosaic_0001>

<llo_original>
// kernel: _forward_impl.1
$region0: #{_forward_impl.1}
  #allocation0 [shape = 'u32[]', space=smem, size = 0x4, offset = 0x4, fixed_abs, tag = 'smem constant byte address 0x4 - core index']
  #allocation1 [shape = 'u32[144,128]{1,0:T(1,128)}', space=vmem, size = 0x12000, scoped, tag = 'internal scratch']
  #allocation2 [shape = 'f32[64,128]{1,0:T(8,128)}', space=vmem, size = 0x8000, scoped, tag = 'scratch operand']
  %s0 = inlined_call_operand.vmem [shape: f32[64,16], index: 0, kind: input, shape index: {}]
  %s1 = inlined_call_operand.vmem [shape: f32[16,128], index: 1, kind: input, shape index: {}]
  %s2 = inlined_call_operand.vmem [shape: f32[32,128], index: 2, kind: input, shape index: {}]
  %s3 = inlined_call_operand.vmem [shape: f32[1,128], index: 3, kind: input, shape index: {}]
  %s4 = inlined_call_operand.vmem [shape: f32[32,128], index: 4, kind: input, shape index: {}]
  %s5 = inlined_call_operand.vmem [shape: f32[32,128], index: 5, kind: input, shape index: {}]
  %s6 = inlined_call_operand.vmem [shape: f32[1,128], index: 6, kind: input, shape index: {}]
  %s7 = inlined_call_operand.vmem [shape: f32[32,128], index: 7, kind: input, shape index: {}]
  %s8 = inlined_call_operand.vmem [shape: f32[1,128], index: 8, kind: input, shape index: {}]
  %s9 = inlined_call_operand.vmem [shape: f32[8,128], index: 9, kind: output, shape index: {}]
  %s10 = sld [smem:[#allocation0]]
  $region46: #{_forward_impl.1} parent=0
    _
  %s12 = ssub.s32 1, %s10
  %s13 = scalar_select 0, %s12, %s10
  // Predicated region
  $region2: #{_forward_impl.1} parent=0 // pred_check
    _
  $region3: #{_forward_impl.1} parent=0 // pred_check_branch
    %15 = sbr.rel (0) target = $region5
  $region4: #{_forward_impl.1} parent=0 // pred_region
    _
  $region5: #{_forward_impl.1} parent=0 // pred_fallthru
    _
  // Predicated region
  $region6: #{_forward_impl.1} parent=0 // pred_check
    _
  $region7: #{_forward_impl.1} parent=0 // pred_check_branch
    %17 = sbr.rel (0) target = $region9
  $region8: #{_forward_impl.1} parent=0 // pred_region
    _
  $region9: #{_forward_impl.1} parent=0 // pred_fallthru
    _
  // Predicated region
  $region10: #{_forward_impl.1} parent=0 // pred_check
    _
  $region11: #{_forward_impl.1} parent=0 // pred_check_branch
    %19 = sbr.rel (0) target = $region13
  $region12: #{_forward_impl.1} parent=0 // pred_region
    _
  $region13: #{_forward_impl.1} parent=0 // pred_fallthru
    _
  // Predicated region
  $region14: #{_forward_impl.1} parent=0 // pred_check
    _
  $region15: #{_forward_impl.1} parent=0 // pred_check_branch
    %21 = sbr.rel (0) target = $region17
  $region16: #{_forward_impl.1} parent=0 // pred_region
    _
  $region17: #{_forward_impl.1} parent=0 // pred_fallthru
    _
  // Predicated region
  $region18: #{_forward_impl.1} parent=0 // pred_check
    _
  $region19: #{_forward_impl.1} parent=0 // pred_check_branch
    %23 = sbr.rel (0) target = $region21
  $region20: #{_forward_impl.1} parent=0 // pred_region
    _
  $region21: #{_forward_impl.1} parent=0 // pred_fallthru
    _
  // Predicated region
  $region22: #{_forward_impl.1} parent=0 // pred_check
    _
  $region23: #{_forward_impl.1} parent=0 // pred_check_branch
    %25 = sbr.rel (0) target = $region25
  $region24: #{_forward_impl.1} parent=0 // pred_region
    _
  $region25: #{_forward_impl.1} parent=0 // pred_fallthru
    _
  // Predicated region
  $region26: #{_forward_impl.1} parent=0 // pred_check
    _
  $region27: #{_forward_impl.1} parent=0 // pred_check_branch
    %27 = sbr.rel (0) target = $region29
  $region28: #{_forward_impl.1} parent=0 // pred_region
    _
  $region29: #{_forward_impl.1} parent=0 // pred_fallthru
    _
  // Predicated region
  $region30: #{_forward_impl.1} parent=0 // pred_check
    _
  $region31: #{_forward_impl.1} parent=0 // pred_check_branch
    %29 = sbr.rel (0) target = $region33
  $region32: #{_forward_impl.1} parent=0 // pred_region
    _
  $region33: #{_forward_impl.1} parent=0 // pred_fallthru
    _
  // Predicated region
  $region34: #{_forward_impl.1} parent=0 // pred_check
    _
  $region35: #{_forward_impl.1} parent=0 // pred_check_branch
    %31 = sbr.rel (0) target = $region37
  $region36: #{_forward_impl.1} parent=0 // pred_region
    _
  $region37: #{_forward_impl.1} parent=0 // pred_fallthru
    _
  %v32 = vld [vmem:[%s0] sm:$0xff]
  %v33 = vld [vmem:[%s0 + $0x8] sm:$0xff]
  %v34 = vld [vmem:[%s0 + $0x10] sm:$0xff]
  %v35 = vld [vmem:[%s0 + $0x18] sm:$0xff]
  %v36 = vld [vmem:[%s0 + $0x20] sm:$0xff]
  %v37 = vld [vmem:[%s0 + $0x28] sm:$0xff]
  %v38 = vld [vmem:[%s0 + $0x30] sm:$0xff]
  %v39 = vld [vmem:[%s0 + $0x38] sm:$0xff]
  %v40 = vld [vmem:[%s1] sm:$0xff]
  %v41 = vld [vmem:[%s1 + $0x8] sm:$0xff]
  %v42 = vld [vmem:[%s3] sm:$0x1]
  %v44 = vlaneseq
  %v45 = vshrl.u32 %v44, 7
  %v46 = vsub.s32 0, %v45
  %v47 = vrot.slane %v42, %v46
  %vm49 = vcmask 130048
  %v51 = vsel %vm49, %v32, 0
  %v54 = vsel %vm49, %v33, 0
  %v57 = vsel %vm49, %v34, 0
  %v60 = vsel %vm49, %v35, 0
  %v63 = vsel %vm49, %v36, 0
  %v66 = vsel %vm49, %v37, 0
  %v69 = vsel %vm49, %v38, 0
  %v72 = vsel %vm49, %v39, 0
  %74 = vmatprep.subr.mxu0 0.0
  %75 = vmatpush1.msra.mxu0 0.0
  %76 = vmatprep.subr.mxu0 0.0
  %77 = vmatpush1.msra.mxu0 0.0
  %78 = vmatprep.subr.mxu0 0.0
  %79 = vmatpush1.msra.mxu0 0.0
  %80 = vmatprep.subr.mxu0 0.0
  %81 = vmatpush1.msra.mxu0 0.0
  %82 = vmatprep.subr.mxu0 0.0
  %83 = vmatpush1.msra.mxu0 0.0
  %84 = vmatprep.subr.mxu0 0.0
  %85 = vmatpush1.msra.mxu0 0.0
  %86 = vmatprep.subr.mxu0 0.0
  %87 = vmatpush1.msra.mxu0 0.0
  %88 = vmatprep.subr.mxu0 0.0
  %89 = vmatpush1.msra.mxu0 0.0
  %90 = vmatprep.subr.mxu0 0.0
  %91 = vmatpush1.msra.mxu0 0.0
  %92 = vmatprep.subr.mxu0 0.0
  %93 = vmatpush1.msra.mxu0 0.0
  %94 = vmatprep.subr.mxu0 0.0
  %95 = vmatpush1.msra.mxu0 0.0
  %96 = vmatprep.subr.mxu0 0.0
  %97 = vmatpush1.msra.mxu0 0.0
  %98 = vmatprep.subr.mxu0 0.0
  %99 = vmatpush1.msra.mxu0 0.0
  %100 = vmatprep.subr.mxu0 0.0
  %101 = vmatpush1.msra.mxu0 0.0
  %102 = vmatprep.subr.mxu0 0.0
  %103 = vmatpush1.msra.mxu0 %v41
  %104 = vmatprep.subr.mxu0 0.0
  %105 = vmatpush1.msra.mxu0 %v40
  %106 = vmatprep.subr.mxu0 0.0
  %107 = vmatpush2.msra.mxu0 0.0
  %108 = vmatprep.subr.mxu0 0.0
  %109 = vmatpush2.msra.mxu0 0.0
  %110 = vmatprep.subr.mxu0 0.0
  %111 = vmatpush2.msra.mxu0 0.0
  %112 = vmatprep.subr.mxu0 0.0
  %113 = vmatpush2.msra.mxu0 0.0
  %114 = vmatprep.subr.mxu0 0.0
  %115 = vmatpush2.msra.mxu0 0.0
  %116 = vmatprep.subr.mxu0 0.0
  %117 = vmatpush2.msra.mxu0 0.0
  %118 = vmatprep.subr.mxu0 0.0
  %119 = vmatpush2.msra.mxu0 0.0
  %120 = vmatprep.subr.mxu0 0.0
  %121 = vmatpush2.msra.mxu0 0.0
  %122 = vmatprep.subr.mxu0 0.0
  %123 = vmatpush2.msra.mxu0 0.0
  %124 = vmatprep.subr.mxu0 0.0
  %125 = vmatpush2.msra.mxu0 0.0
  %126 = vmatprep.subr.mxu0 0.0
  %127 = vmatpush2.msra.mxu0 0.0
  %128 = vmatprep.subr.mxu0 0.0
  %129 = vmatpush2.msra.mxu0 0.0
  %130 = vmatprep.subr.mxu0 0.0
  %131 = vmatpush2.msra.mxu0 0.0
  %132 = vmatprep.subr.mxu0 0.0
  %133 = vmatpush2.msra.mxu0 0.0
  %134 = vmatprep.subr.mxu0 0.0
  %135 = vmatpush2.msra.mxu0 0.0
  %136 = vmatprep.subr.mxu0 0.0
  %137 = vmatpush2.msra.mxu0 0.0
  %138 = vmatprep.mubr.f32.mxu0 0.0
  %139 = vmatmul.mubr.f32.gmra.mxu0 %v51
  %v140 = vpop.f32.mrf.mxu0
  %v141 = vadd.f32 %v47, %v140
  %v142 = vpop.f32.mrf.mxu0
  %143 = vmatprep.mubr.f32.mxu0 0.0
  %144 = vmatmul.mubr.f32.gmra.mxu0 %v54
  %v145 = vpop.f32.mrf.mxu0
  %v146 = vadd.f32 %v47, %v145
  %v147 = vpop.f32.mrf.mxu0
  %148 = vmatprep.mubr.f32.mxu0 0.0
  %149 = vmatmul.mubr.f32.gmra.mxu0 %v57
  %v150 = vpop.f32.mrf.mxu0
  %v151 = vadd.f32 %v47, %v150
  %v152 = vpop.f32.mrf.mxu0
  %153 = vmatprep.mubr.f32.mxu0 0.0
  %154 = vmatmul.mubr.f32.gmra.mxu0 %v60
  %v155 = vpop.f32.mrf.mxu0
  %v156 = vadd.f32 %v47, %v155
  %v157 = vpop.f32.mrf.mxu0
  %158 = vmatprep.mubr.f32.mxu0 0.0
  %159 = vmatmul.mubr.f32.gmra.mxu0 %v63
  %v160 = vpop.f32.mrf.mxu0
  %v161 = vadd.f32 %v47, %v160
  %v162 = vpop.f32.mrf.mxu0
  %163 = vmatprep.mubr.f32.mxu0 0.0
  %164 = vmatmul.mubr.f32.gmra.mxu0 %v66
  %v165 = vpop.f32.mrf.mxu0
  %v166 = vadd.f32 %v47, %v165
  %v167 = vpop.f32.mrf.mxu0
  %168 = vmatprep.mubr.f32.mxu0 0.0
  %169 = vmatmul.mubr.f32.gmra.mxu0 %v69
  %v170 = vpop.f32.mrf.mxu0
  %v171 = vadd.f32 %v47, %v170
  %v172 = vpop.f32.mrf.mxu0
  %173 = vmatprep.mubr.f32.mxu0 0.0
  %174 = vmatmul.mubr.f32.gmra.mxu0 %v72
  %v175 = vpop.f32.mrf.mxu0
  %v176 = vadd.f32 %v47, %v175
  %v177 = vpop.f32.mrf.mxu0
  %178 = vdwg.mxu0
  %179 = vst [vmem:[#allocation2] sm:$0xff] %v141
  %180 = vst [vmem:[#allocation2 + $0x8] sm:$0xff] %v146
  %181 = vst [vmem:[#allocation2 + $0x10] sm:$0xff] %v151
  %182 = vst [vmem:[#allocation2 + $0x18] sm:$0xff] %v156
  %183 = vst [vmem:[#allocation2 + $0x20] sm:$0xff] %v161
  %184 = vst [vmem:[#allocation2 + $0x28] sm:$0xff] %v166
  %185 = vst [vmem:[#allocation2 + $0x30] sm:$0xff] %v171
  %186 = vst [vmem:[#allocation2 + $0x38] sm:$0xff] %v176
  %v187 = vld [vmem:[%s2] sm:$0xff]
  %v188 = vld [vmem:[%s2 + $0x8] sm:$0xff]
  %v189 = vld [vmem:[%s2 + $0x10] sm:$0xff]
  %v190 = vld [vmem:[%s2 + $0x18] sm:$0xff]
  %v191 = vld [vmem:[%s4] sm:$0xff]
  %v192 = vld [vmem:[%s4 + $0x8] sm:$0xff]
  %v193 = vld [vmem:[%s4 + $0x10] sm:$0xff]
  %v194 = vld [vmem:[%s4 + $0x18] sm:$0xff]
  %v195 = vld [vmem:[%s5] sm:$0xff]
  %v196 = vld [vmem:[%s5 + $0x8] sm:$0xff]
  %v197 = vld [vmem:[%s5 + $0x10] sm:$0xff]
  %v198 = vld [vmem:[%s5 + $0x18] sm:$0xff]
  %v199 = vld [vmem:[%s6] sm:$0x1]
  %v201 = vlaneseq
  %v202 = vshrl.u32 %v201, 7
  %v203 = vsub.s32 0, %v202
  %v204 = vrot.slane %v199, %v203
  %v206 = vlaneseq
  %v207 = vand.u32 %v206, 127
  %vm208 = vcmp.ge.s32.totalorder %v207, 64
  %vm209 = vcmp.lt.s32.totalorder %v207, 96
  %vm210 = vmand %vm208, %vm209
  %v211 = vsel %vm210, 1.0, 0.5
  %v212 = vsel %vm210, 0.0, 0.5
  %v213 = vld [vmem:[#allocation2] sm:$0xff]
  %vm214 = vcmask 261120
  %v216 = vsel %vm214, 0.0, 0
  %218 = vmatprep.subr.mxu0 0.0
  %219 = vmatpush1.msra.mxu0 0.0
  %220 = vmatprep.subr.mxu0 0.0
  %221 = vmatpush1.msra.mxu0 0.0
  %222 = vmatprep.subr.mxu0 0.0
  %223 = vmatpush1.msra.mxu0 0.0
  %224 = vmatprep.subr.mxu0 0.0
  %225 = vmatpush1.msra.mxu0 0.0
  %226 = vmatprep.subr.mxu0 0.0
  %227 = vmatpush1.msra.mxu0 0.0
  %228 = vmatprep.subr.mxu0 0.0
  %229 = vmatpush1.msra.mxu0 0.0
  %230 = vmatprep.subr.mxu0 0.0
  %231 = vmatpush1.msra.mxu0 0.0
  %232 = vmatprep.subr.mxu0 0.0
  %233 = vmatpush1.msra.mxu0 0.0
  %234 = vmatprep.subr.mxu0 0.0
  %235 = vmatpush1.msra.mxu0 0.0
  %236 = vmatprep.subr.mxu0 0.0
  %237 = vmatpush1.msra.mxu0 0.0
  %238 = vmatprep.subr.mxu0 0.0
  %239 = vmatpush1.msra.mxu0 0.0
  %240 = vmatprep.subr.mxu0 0.0
  %241 = vmatpush1.msra.mxu0 0.0
  %242 = vmatprep.subr.mxu0 0.0
  %243 = vmatpush1.msra.mxu0 %v190
  %244 = vmatprep.subr.mxu0 0.0
  %245 = vmatpush1.msra.mxu0 %v189
  %246 = vmatprep.subr.mxu0 0.0
  %247 = vmatpush1.msra.mxu0 %v188
  %248 = vmatprep.subr.mxu0 0.0
  %249 = vmatpush1.msra.mxu0 %v187
  %250 = vmatprep.subr.mxu0 0.0
  %251 = vmatpush2.msra.mxu0 0.0
  %252 = vmatprep.subr.mxu0 0.0
  %253 = vmatpush2.msra.mxu0 0.0
  %254 = vmatprep.subr.mxu0 0.0
  %255 = vmatpush2.msra.mxu0 0.0
  %256 = vmatprep.subr.mxu0 0.0
  %257 = vmatpush2.msra.mxu0 0.0
  %258 = vmatprep.subr.mxu0 0.0
  %259 = vmatpush2.msra.mxu0 0.0
  %260 = vmatprep.subr.mxu0 0.0
  %261 = vmatpush2.msra.mxu0 0.0
  %262 = vmatprep.subr.mxu0 0.0
  %263 = vmatpush2.msra.mxu0 0.0
  %264 = vmatprep.subr.mxu0 0.0
  %265 = vmatpush2.msra.mxu0 0.0
  %266 = vmatprep.subr.mxu0 0.0
  %267 = vmatpush2.msra.mxu0 0.0
  %268 = vmatprep.subr.mxu0 0.0
  %269 = vmatpush2.msra.mxu0 0.0
  %270 = vmatprep.subr.mxu0 0.0
  %271 = vmatpush2.msra.mxu0 0.0
  %272 = vmatprep.subr.mxu0 0.0
  %273 = vmatpush2.msra.mxu0 0.0
  %274 = vmatprep.subr.mxu0 0.0
  %275 = vmatpush2.msra.mxu0 0.0
  %276 = vmatprep.subr.mxu0 0.0
  %277 = vmatpush2.msra.mxu0 0.0
  %278 = vmatprep.subr.mxu0 0.0
  %279 = vmatpush2.msra.mxu0 0.0
  %280 = vmatprep.subr.mxu0 0.0
  %281 = vmatpush2.msra.mxu0 0.0
  %282 = vmatprep.mubr.f32.mxu0 0.0
  %283 = vmatmul.mubr.f32.gmra.mxu0 %v216
  %v284 = vpop.f32.mrf.mxu0
  %v285 = vadd.f32 0.0, %v284
  %v286 = vpop.f32.mrf.mxu0
  %287 = vdwg.mxu0
  %v288 = vadd.f32 %v213, %v285
  %v289 = vmul.f32 %v288, %v211
  %v290 = vtanh.pop %v289
  %v291 = vmul.f32 %v290, %v211
  %v292 = vadd.f32 %v291, %v212
  %v293 = vmul.f32 %v292, 0.0
  %295 = vrot.lane.b32.xlu0 %v292, 64
  %v296 = vpop.permute.xlu0 %295
  %v298 = vmul.f32 %v292, %v296
  %300 = vrot.lane.b32.xlu0 %v298, 32
  %v301 = vpop.permute.xlu0 %300
  %v303 = vadd.f32 %v293, %v301
  %v304 = vtanh.pop %v303
  %306 = vrot.lane.b32.xlu0 %v304, 64
  %v307 = vpop.permute.xlu0 %306
  %v309 = vmul.f32 %v292, %v307
  %v310 = vld [vmem:[#allocation2 + $0x8] sm:$0xff]
  %312 = vrot.lane.b32.xlu0 %v309, 32
  %v313 = vpop.permute.xlu0 %312
  %v314 = vsel %vm214, %v313, 0
  %316 = vmatprep.subr.mxu0 0.0
  %317 = vmatpush1.msra.mxu0 0.0
  %318 = vmatprep.subr.mxu0 0.0
  %319 = vmatpush1.msra.mxu0 0.0
  %320 = vmatprep.subr.mxu0 0.0
  %321 = vmatpush1.msra.mxu0 0.0
  %322 = vmatprep.subr.mxu0 0.0
  %323 = vmatpush1.msra.mxu0 0.0
  %324 = vmatprep.subr.mxu0 0.0
  %325 = vmatpush1.msra.mxu0 0.0
  %326 = vmatprep.subr.mxu0 0.0
  %327 = vmatpush1.msra.mxu0 0.0
  %328 = vmatprep.subr.mxu0 0.0
  %329 = vmatpush1.msra.mxu0 0.0
  %330 = vmatprep.subr.mxu0 0.0
  %331 = vmatpush1.msra.mxu0 0.0
  %332 = vmatprep.subr.mxu0 0.0
  %333 = vmatpush1.msra.mxu0 0.0
  %334 = vmatprep.subr.mxu0 0.0
  %335 = vmatpush1.msra.mxu0 0.0
  %336 = vmatprep.subr.mxu0 0.0
  %337 = vmatpush1.msra.mxu0 0.0
  %338 = vmatprep.subr.mxu0 0.0
  %339 = vmatpush1.msra.mxu0 0.0
  %340 = vmatprep.subr.mxu0 0.0
  %341 = vmatpush1.msra.mxu0 %v190
  %342 = vmatprep.subr.mxu0 0.0
  %343 = vmatpush1.msra.mxu0 %v189
  %344 = vmatprep.subr.mxu0 0.0
  %345 = vmatpush1.msra.mxu0 %v188
  %346 = vmatprep.subr.mxu0 0.0
  %347 = vmatpush1.msra.mxu0 %v187
  %348 = vmatprep.subr.mxu0 0.0
  %349 = vmatpush2.msra.mxu0 0.0
  %350 = vmatprep.subr.mxu0 0.0
  %351 = vmatpush2.msra.mxu0 0.0
  %352 = vmatprep.subr.mxu0 0.0
  %353 = vmatpush2.msra.mxu0 0.0
  %354 = vmatprep.subr.mxu0 0.0
  %355 = vmatpush2.msra.mxu0 0.0
  %356 = vmatprep.subr.mxu0 0.0
  %357 = vmatpush2.msra.mxu0 0.0
  %358 = vmatprep.subr.mxu0 0.0
  %359 = vmatpush2.msra.mxu0 0.0
  %360 = vmatprep.subr.mxu0 0.0
  %361 = vmatpush2.msra.mxu0 0.0
  %362 = vmatprep.subr.mxu0 0.0
  %363 = vmatpush2.msra.mxu0 0.0
  %364 = vmatprep.subr.mxu0 0.0
  %365 = vmatpush2.msra.mxu0 0.0
  %366 = vmatprep.subr.mxu0 0.0
  %367 = vmatpush2.msra.mxu0 0.0
  %368 = vmatprep.subr.mxu0 0.0
  %369 = vmatpush2.msra.mxu0 0.0
  %370 = vmatprep.subr.mxu0 0.0
  %371 = vmatpush2.msra.mxu0 0.0
  %372 = vmatprep.subr.mxu0 0.0
  %373 = vmatpush2.msra.mxu0 0.0
  %374 = vmatprep.subr.mxu0 0.0
  %375 = vmatpush2.msra.mxu0 0.0
  %376 = vmatprep.subr.mxu0 0.0
  %377 = vmatpush2.msra.mxu0 0.0
  %378 = vmatprep.subr.mxu0 0.0
  %379 = vmatpush2.msra.mxu0 0.0
  %380 = vmatprep.mubr.f32.mxu0 0.0
  %381 = vmatmul.mubr.f32.gmra.mxu0 %v314
  %v382 = vpop.f32.mrf.mxu0
  %v383 = vadd.f32 0.0, %v382
  %v384 = vpop.f32.mrf.mxu0
  %385 = vdwg.mxu0
  %v386 = vadd.f32 %v310, %v383
  %v387 = vmul.f32 %v386, %v211
  %v388 = vtanh.pop %v387
  %v389 = vmul.f32 %v388, %v211
  %v390 = vadd.f32 %v389, %v212
  %v391 = vmul.f32 %v390, %v303
  %393 = vrot.lane.b32.xlu0 %v390, 64
  %v394 = vpop.permute.xlu0 %393
  %v396 = vmul.f32 %v390, %v394
  %398 = vrot.lane.b32.xlu0 %v396, 32
  %v399 = vpop.permute.xlu0 %398
  %v401 = vadd.f32 %v391, %v399
  %v402 = vtanh.pop %v401
  %404 = vrot.lane.b32.xlu0 %v402, 64
  %v405 = vpop.permute.xlu0 %404
  %v407 = vmul.f32 %v390, %v405
  %408 = vmatprep.subr.mxu0 0.0
  %409 = vmatpush1.msra.mxu0 0.0
  %410 = vmatprep.subr.mxu0 0.0
  %411 = vmatpush1.msra.mxu0 0.0
  %412 = vmatprep.subr.mxu0 0.0
  %413 = vmatpush1.msra.mxu0 0.0
  %414 = vmatprep.subr.mxu0 0.0
  %415 = vmatpush1.msra.mxu0 0.0
  %416 = vmatprep.subr.mxu0 0.0
  %417 = vmatpush1.msra.mxu0 0.0
  %418 = vmatprep.subr.mxu0 0.0
  %419 = vmatpush1.msra.mxu0 0.0
  %420 = vmatprep.subr.mxu0 0.0
  %421 = vmatpush1.msra.mxu0 0.0
  %422 = vmatprep.subr.mxu0 0.0
  %423 = vmatpush1.msra.mxu0 0.0
  %424 = vmatprep.subr.mxu0 0.0
  %425 = vmatpush1.msra.mxu0 0.0
  %426 = vmatprep.subr.mxu0 0.0
  %427 = vmatpush1.msra.mxu0 0.0
  %428 = vmatprep.subr.mxu0 0.0
  %429 = vmatpush1.msra.mxu0 0.0
  %430 = vmatprep.subr.mxu0 0.0
  %431 = vmatpush1.msra.mxu0 0.0
  %432 = vmatprep.subr.mxu0 0.0
  %433 = vmatpush1.msra.mxu0 %v198
  %434 = vmatprep.subr.mxu0 0.0
  %435 = vmatpush1.msra.mxu0 %v197
  %436 = vmatprep.subr.mxu0 0.0
  %437 = vmatpush1.msra.mxu0 %v196
  %438 = vmatprep.subr.mxu0 0.0
  %439 = vmatpush1.msra.mxu0 %v195
  %440 = vmatprep.subr.mxu0 0.0
  %441 = vmatpush2.msra.mxu0 0.0
  %442 = vmatprep.subr.mxu0 0.0
  %443 = vmatpush2.msra.mxu0 0.0
  %444 = vmatprep.subr.mxu0 0.0
  %445 = vmatpush2.msra.mxu0 0.0
  %446 = vmatprep.subr.mxu0 0.0
  %447 = vmatpush2.msra.mxu0 0.0
  %448 = vmatprep.subr.mxu0 0.0
  %449 = vmatpush2.msra.mxu0 0.0
  %450 = vmatprep.subr.mxu0 0.0
  %451 = vmatpush2.msra.mxu0 0.0
  %452 = vmatprep.subr.mxu0 0.0
  %453 = vmatpush2.msra.mxu0 0.0
  %454 = vmatprep.subr.mxu0 0.0
  %455 = vmatpush2.msra.mxu0 0.0
  %456 = vmatprep.subr.mxu0 0.0
  %457 = vmatpush2.msra.mxu0 0.0
  %458 = vmatprep.subr.mxu0 0.0
  %459 = vmatpush2.msra.mxu0 0.0
  %460 = vmatprep.subr.mxu0 0.0
  %461 = vmatpush2.msra.mxu0 0.0
  %462 = vmatprep.subr.mxu0 0.0
  %463 = vmatpush2.msra.mxu0 0.0
  %464 = vmatprep.subr.mxu0 0.0
  %465 = vmatpush2.msra.mxu0 0.0
  %466 = vmatprep.subr.mxu0 0.0
  %467 = vmatpush2.msra.mxu0 0.0
  %468 = vmatprep.subr.mxu0 0.0
  %469 = vmatpush2.msra.mxu0 0.0
  %470 = vmatprep.subr.mxu0 0.0
  %471 = vmatpush2.msra.mxu0 0.0
  %472 = vmatprep.mubr.f32.mxu0 0.0
  %473 = vmatmul.mubr.f32.gmra.mxu0 %v216
  %v474 = vpop.f32.mrf.mxu0
  %v475 = vadd.f32 0.0, %v474
  %v476 = vpop.f32.mrf.mxu0
  %477 = vdwg.mxu0
  %478 = vmatprep.subr.mxu0 0.0
  %479 = vmatpush1.msra.mxu0 0.0
  %480 = vmatprep.subr.mxu0 0.0
  %481 = vmatpush1.msra.mxu0 0.0
  %482 = vmatprep.subr.mxu0 0.0
  %483 = vmatpush1.msra.mxu0 0.0
  %484 = vmatprep.subr.mxu0 0.0
  %485 = vmatpush1.msra.mxu0 0.0
  %486 = vmatprep.subr.mxu0 0.0
  %487 = vmatpush1.msra.mxu0 0.0
  %488 = vmatprep.subr.mxu0 0.0
  %489 = vmatpush1.msra.mxu0 0.0
  %490 = vmatprep.subr.mxu0 0.0
  %491 = vmatpush1.msra.mxu0 0.0
  %492 = vmatprep.subr.mxu0 0.0
  %493 = vmatpush1.msra.mxu0 0.0
  %494 = vmatprep.subr.mxu0 0.0
  %495 = vmatpush1.msra.mxu0 0.0
  %496 = vmatprep.subr.mxu0 0.0
  %497 = vmatpush1.msra.mxu0 0.0
  %498 = vmatprep.subr.mxu0 0.0
  %499 = vmatpush1.msra.mxu0 0.0
  %500 = vmatprep.subr.mxu0 0.0
  %501 = vmatpush1.msra.mxu0 0.0
  %502 = vmatprep.subr.mxu0 0.0
  %503 = vmatpush1.msra.mxu0 %v194
  %504 = vmatprep.subr.mxu0 0.0
  %505 = vmatpush1.msra.mxu0 %v193
  %506 = vmatprep.subr.mxu0 0.0
  %507 = vmatpush1.msra.mxu0 %v192
  %508 = vmatprep.subr.mxu0 0.0
  %509 = vmatpush1.msra.mxu0 %v191
  %510 = vmatprep.subr.mxu0 0.0
  %511 = vmatpush2.msra.mxu0 0.0
  %512 = vmatprep.subr.mxu0 0.0
  %513 = vmatpush2.msra.mxu0 0.0
  %514 = vmatprep.subr.mxu0 0.0
  %515 = vmatpush2.msra.mxu0 0.0
  %516 = vmatprep.subr.mxu0 0.0
  %517 = vmatpush2.msra.mxu0 0.0
  %518 = vmatprep.subr.mxu0 0.0
  %519 = vmatpush2.msra.mxu0 0.0
  %520 = vmatprep.subr.mxu0 0.0
  %521 = vmatpush2.msra.mxu0 0.0
  %522 = vmatprep.subr.mxu0 0.0
  %523 = vmatpush2.msra.mxu0 0.0
  %524 = vmatprep.subr.mxu0 0.0
  %525 = vmatpush2.msra.mxu0 0.0
  %526 = vmatprep.subr.mxu0 0.0
  %527 = vmatpush2.msra.mxu0 0.0
  %528 = vmatprep.subr.mxu0 0.0
  %529 = vmatpush2.msra.mxu0 0.0
  %530 = vmatprep.subr.mxu0 0.0
  %531 = vmatpush2.msra.mxu0 0.0
  %532 = vmatprep.subr.mxu0 0.0
  %533 = vmatpush2.msra.mxu0 0.0
  %534 = vmatprep.subr.mxu0 0.0
  %535 = vmatpush2.msra.mxu0 0.0
  %536 = vmatprep.subr.mxu0 0.0
  %537 = vmatpush2.msra.mxu0 0.0
  %538 = vmatprep.subr.mxu0 0.0
  %539 = vmatpush2.msra.mxu0 0.0
  %540 = vmatprep.subr.mxu0 0.0
  %541 = vmatpush2.msra.mxu0 0.0
  %542 = vmatprep.mubr.f32.mxu0 0.0
  %543 = vmatmul.mubr.f32.gmra.mxu0 %v314
  %v544 = vpop.f32.mrf.mxu0
  %v545 = vadd.f32 %v475, %v544
  %v546 = vpop.f32.mrf.mxu0
  %547 = vdwg.mxu0
  %v548 = vadd.f32 %v545, %v204
  %v549 = vmul.f32 %v548, %v211
  %v550 = vtanh.pop %v549
  %v551 = vmul.f32 %v550, %v211
  %v552 = vadd.f32 %v551, %v212
  %v553 = vmul.f32 %v552, 0.0
  %555 = vrot.lane.b32.xlu0 %v552, 64
  %v556 = vpop.permute.xlu0 %555
  %v558 = vmul.f32 %v552, %v556
  %560 = vrot.lane.b32.xlu0 %v558, 32
  %v561 = vpop.permute.xlu0 %560
  %v563 = vadd.f32 %v553, %v561
  %v564 = vtanh.pop %v563
  %566 = vrot.lane.b32.xlu0 %v564, 64
  %v567 = vpop.permute.xlu0 %566
  %v569 = vmul.f32 %v552, %v567
  %v570 = vld [vmem:[#allocation2 + $0x10] sm:$0xff]
  %572 = vrot.lane.b32.xlu0 %v407, 32
  %v573 = vpop.permute.xlu0 %572
  %v574 = vsel %vm214, %v573, 0
  %576 = vmatprep.subr.mxu0 0.0
  %577 = vmatpush1.msra.mxu0 0.0
  %578 = vmatprep.subr.mxu0 0.0
  %579 = vmatpush1.msra.mxu0 0.0
  %580 = vmatprep.subr.mxu0 0.0
  %581 = vmatpush1.msra.mxu0 0.0
  %582 = vmatprep.subr.mxu0 0.0
  %583 = vmatpush1.msra.mxu0 0.0
  %584 = vmatprep.subr.mxu0 0.0
  %585 = vmatpush1.msra.mxu0 0.0
  %586 = vmatprep.subr.mxu0 0.0
  %587 = vmatpush1.msra.mxu0 0.0
  %588 = vmatprep.subr.mxu0 0.0
  %589 = vmatpush1.msra.mxu0 0.0
  %590 = vmatprep.subr.mxu0 0.0
  %591 = vmatpush1.msra.mxu0 0.0
  %592 = vmatprep.subr.mxu0 0.0
  %593 = vmatpush1.msra.mxu0 0.0
  %594 = vmatprep.subr.mxu0 0.0
  %595 = vmatpush1.msra.mxu0 0.0
  %596 = vmatprep.subr.mxu0 0.0
  %597 = vmatpush1.msra.mxu0 0.0
  %598 = vmatprep.subr.mxu0 0.0
  %599 = vmatpush1.msra.mxu0 0.0
  %600 = vmatprep.subr.mxu0 0.0
  %601 = vmatpush1.msra.mxu0 %v190
  %602 = vmatprep.subr.mxu0 0.0
  %603 = vmatpush1.msra.mxu0 %v189
  %604 = vmatprep.subr.mxu0 0.0
  %605 = vmatpush1.msra.mxu0 %v188
  %606 = vmatprep.subr.mxu0 0.0
  %607 = vmatpush1.msra.mxu0 %v187
  %608 = vmatprep.subr.mxu0 0.0
  %609 = vmatpush2.msra.mxu0 0.0
  %610 = vmatprep.subr.mxu0 0.0
  %611 = vmatpush2.msra.mxu0 0.0
  %612 = vmatprep.subr.mxu0 0.0
  %613 = vmatpush2.msra.mxu0 0.0
  %614 = vmatprep.subr.mxu0 0.0
  %615 = vmatpush2.msra.mxu0 0.0
  %616 = vmatprep.subr.mxu0 0.0
  %617 = vmatpush2.msra.mxu0 0.0
  %618 = vmatprep.subr.mxu0 0.0
  %619 = vmatpush2.msra.mxu0 0.0
  %620 = vmatprep.subr.mxu0 0.0
  %621 = vmatpush2.msra.mxu0 0.0
  %622 = vmatprep.subr.mxu0 0.0
  %623 = vmatpush2.msra.mxu0 0.0
  %624 = vmatprep.subr.mxu0 0.0
  %625 = vmatpush2.msra.mxu0 0.0
  %626 = vmatprep.subr.mxu0 0.0
  %627 = vmatpush2.msra.mxu0 0.0
  %628 = vmatprep.subr.mxu0 0.0
  %629 = vmatpush2.msra.mxu0 0.0
  %630 = vmatprep.subr.mxu0 0.0
  %631 = vmatpush2.msra.mxu0 0.0
  %632 = vmatprep.subr.mxu0 0.0
  %633 = vmatpush2.msra.mxu0 0.0
  %634 = vmatprep.subr.mxu0 0.0
  %635 = vmatpush2.msra.mxu0 0.0
  %636 = vmatprep.subr.mxu0 0.0
  %637 = vmatpush2.msra.mxu0 0.0
  %638 = vmatprep.subr.mxu0 0.0
  %639 = vmatpush2.msra.mxu0 0.0
  %640 = vmatprep.mubr.f32.mxu0 0.0
  %641 = vmatmul.mubr.f32.gmra.mxu0 %v574
  %v642 = vpop.f32.mrf.mxu0
  %v643 = vadd.f32 0.0, %v642
  %v644 = vpop.f32.mrf.mxu0
  %645 = vdwg.mxu0
  %v646 = vadd.f32 %v570, %v643
  %v647 = vmul.f32 %v646, %v211
  %v648 = vtanh.pop %v647
  %v649 = vmul.f32 %v648, %v211
  %v650 = vadd.f32 %v649, %v212
  %v651 = vmul.f32 %v650, %v401
  %653 = vrot.lane.b32.xlu0 %v650, 64
  %v654 = vpop.permute.xlu0 %653
  %v656 = vmul.f32 %v650, %v654
  %658 = vrot.lane.b32.xlu0 %v656, 32
  %v659 = vpop.permute.xlu0 %658
  %v661 = vadd.f32 %v651, %v659
  %v662 = vtanh.pop %v661
  %664 = vrot.lane.b32.xlu0 %v662, 64
  %v665 = vpop.permute.xlu0 %664
  %v667 = vmul.f32 %v650, %v665
  %669 = vrot.lane.b32.xlu0 %v569, 32
  %v670 = vpop.permute.xlu0 %669
  %v671 = vsel %vm214, %v670, 0
  %673 = vmatprep.subr.mxu0 0.0
  %674 = vmatpush1.msra.mxu0 0.0
  %675 = vmatprep.subr.mxu0 0.0
  %676 = vmatpush1.msra.mxu0 0.0
  %677 = vmatprep.subr.mxu0 0.0
  %678 = vmatpush1.msra.mxu0 0.0
  %679 = vmatprep.subr.mxu0 0.0
  %680 = vmatpush1.msra.mxu0 0.0
  %681 = vmatprep.subr.mxu0 0.0
  %682 = vmatpush1.msra.mxu0 0.0
  %683 = vmatprep.subr.mxu0 0.0
  %684 = vmatpush1.msra.mxu0 0.0
  %685 = vmatprep.subr.mxu0 0.0
  %686 = vmatpush1.msra.mxu0 0.0
  %687 = vmatprep.subr.mxu0 0.0
  %688 = vmatpush1.msra.mxu0 0.0
  %689 = vmatprep.subr.mxu0 0.0
  %690 = vmatpush1.msra.mxu0 0.0
  %691 = vmatprep.subr.mxu0 0.0
  %692 = vmatpush1.msra.mxu0 0.0
  %693 = vmatprep.subr.mxu0 0.0
  %694 = vmatpush1.msra.mxu0 0.0
  %695 = vmatprep.subr.mxu0 0.0
  %696 = vmatpush1.msra.mxu0 0.0
  %697 = vmatprep.subr.mxu0 0.0
  %698 = vmatpush1.msra.mxu0 %v198
  %699 = vmatprep.subr.mxu0 0.0
  %700 = vmatpush1.msra.mxu0 %v197
  %701 = vmatprep.subr.mxu0 0.0
  %702 = vmatpush1.msra.mxu0 %v196
  %703 = vmatprep.subr.mxu0 0.0
  %704 = vmatpush1.msra.mxu0 %v195
  %705 = vmatprep.subr.mxu0 0.0
  %706 = vmatpush2.msra.mxu0 0.0
  %707 = vmatprep.subr.mxu0 0.0
  %708 = vmatpush2.msra.mxu0 0.0
  %709 = vmatprep.subr.mxu0 0.0
  %710 = vmatpush2.msra.mxu0 0.0
  %711 = vmatprep.subr.mxu0 0.0
  %712 = vmatpush2.msra.mxu0 0.0
  %713 = vmatprep.subr.mxu0 0.0
  %714 = vmatpush2.msra.mxu0 0.0
  %715 = vmatprep.subr.mxu0 0.0
  %716 = vmatpush2.msra.mxu0 0.0
  %717 = vmatprep.subr.mxu0 0.0
  %718 = vmatpush2.msra.mxu0 0.0
  %719 = vmatprep.subr.mxu0 0.0
  %720 = vmatpush2.msra.mxu0 0.0
  %721 = vmatprep.subr.mxu0 0.0
  %722 = vmatpush2.msra.mxu0 0.0
  %723 = vmatprep.subr.mxu0 0.0
  %724 = vmatpush2.msra.mxu0 0.0
  %725 = vmatprep.subr.mxu0 0.0
  %726 = vmatpush2.msra.mxu0 0.0
  %727 = vmatprep.subr.mxu0 0.0
  %728 = vmatpush2.msra.mxu0 0.0
  %729 = vmatprep.subr.mxu0 0.0
  %730 = vmatpush2.msra.mxu0 0.0
  %731 = vmatprep.subr.mxu0 0.0
  %732 = vmatpush2.msra.mxu0 0.0
  %733 = vmatprep.subr.mxu0 0.0
  %734 = vmatpush2.msra.mxu0 0.0
  %735 = vmatprep.subr.mxu0 0.0
  %736 = vmatpush2.msra.mxu0 0.0
  %737 = vmatprep.mubr.f32.mxu0 0.0
  %738 = vmatmul.mubr.f32.gmra.mxu0 %v671
  %v739 = vpop.f32.mrf.mxu0
  %v740 = vadd.f32 0.0, %v739
  %v741 = vpop.f32.mrf.mxu0
  %742 = vdwg.mxu0
  %743 = vmatprep.subr.mxu0 0.0
  %744 = vmatpush1.msra.mxu0 0.0
  %745 = vmatprep.subr.mxu0 0.0
  %746 = vmatpush1.msra.mxu0 0.0
  %747 = vmatprep.subr.mxu0 0.0
  %748 = vmatpush1.msra.mxu0 0.0
  %749 = vmatprep.subr.mxu0 0.0
  %750 = vmatpush1.msra.mxu0 0.0
  %751 = vmatprep.subr.mxu0 0.0
  %752 = vmatpush1.msra.mxu0 0.0
  %753 = vmatprep.subr.mxu0 0.0
  %754 = vmatpush1.msra.mxu0 0.0
  %755 = vmatprep.subr.mxu0 0.0
  %756 = vmatpush1.msra.mxu0 0.0
  %757 = vmatprep.subr.mxu0 0.0
  %758 = vmatpush1.msra.mxu0 0.0
  %759 = vmatprep.subr.mxu0 0.0
  %760 = vmatpush1.msra.mxu0 0.0
  %761 = vmatprep.subr.mxu0 0.0
  %762 = vmatpush1.msra.mxu0 0.0
  %763 = vmatprep.subr.mxu0 0.0
  %764 = vmatpush1.msra.mxu0 0.0
  %765 = vmatprep.subr.mxu0 0.0
  %766 = vmatpush1.msra.mxu0 0.0
  %767 = vmatprep.subr.mxu0 0.0
  %768 = vmatpush1.msra.mxu0 %v194
  %769 = vmatprep.subr.mxu0 0.0
  %770 = vmatpush1.msra.mxu0 %v193
  %771 = vmatprep.subr.mxu0 0.0
  %772 = vmatpush1.msra.mxu0 %v192
  %773 = vmatprep.subr.mxu0 0.0
  %774 = vmatpush1.msra.mxu0 %v191
  %775 = vmatprep.subr.mxu0 0.0
  %776 = vmatpush2.msra.mxu0 0.0
  %777 = vmatprep.subr.mxu0 0.0
  %778 = vmatpush2.msra.mxu0 0.0
  %779 = vmatprep.subr.mxu0 0.0
  %780 = vmatpush2.msra.mxu0 0.0
  %781 = vmatprep.subr.mxu0 0.0
  %782 = vmatpush2.msra.mxu0 0.0
  %783 = vmatprep.subr.mxu0 0.0
  %784 = vmatpush2.msra.mxu0 0.0
  %785 = vmatprep.subr.mxu0 0.0
  %786 = vmatpush2.msra.mxu0 0.0
  %787 = vmatprep.subr.mxu0 0.0
  %788 = vmatpush2.msra.mxu0 0.0
  %789 = vmatprep.subr.mxu0 0.0
  %790 = vmatpush2.msra.mxu0 0.0
  %791 = vmatprep.subr.mxu0 0.0
  %792 = vmatpush2.msra.mxu0 0.0
  %793 = vmatprep.subr.mxu0 0.0
  %794 = vmatpush2.msra.mxu0 0.0
  %795 = vmatprep.subr.mxu0 0.0
  %796 = vmatpush2.msra.mxu0 0.0
  %797 = vmatprep.subr.mxu0 0.0
  %798 = vmatpush2.msra.mxu0 0.0
  %799 = vmatprep.subr.mxu0 0.0
  %800 = vmatpush2.msra.mxu0 0.0
  %801 = vmatprep.subr.mxu0 0.0
  %802 = vmatpush2.msra.mxu0 0.0
  %803 = vmatprep.subr.mxu0 0.0
  %804 = vmatpush2.msra.mxu0 0.0
  %805 = vmatprep.subr.mxu0 0.0
  %806 = vmatpush2.msra.mxu0 0.0
  %807 = vmatprep.mubr.f32.mxu0 0.0
  %808 = vmatmul.mubr.f32.gmra.mxu0 %v574
  %v809 = vpop.f32.mrf.mxu0
  %v810 = vadd.f32 %v740, %v809
  %v811 = vpop.f32.mrf.mxu0
  %812 = vdwg.mxu0
  %v813 = vadd.f32 %v810, %v204
  %v814 = vmul.f32 %v813, %v211
  %v815 = vtanh.pop %v814
  %v816 = vmul.f32 %v815, %v211
  %v817 = vadd.f32 %v816, %v212
  %v818 = vmul.f32 %v817, %v563
  %820 = vrot.lane.b32.xlu0 %v817, 64
  %v821 = vpop.permute.xlu0 %820
  %v823 = vmul.f32 %v817, %v821
  %825 = vrot.lane.b32.xlu0 %v823, 32
  %v826 = vpop.permute.xlu0 %825
  %v828 = vadd.f32 %v818, %v826
  %v829 = vtanh.pop %v828
  %831 = vrot.lane.b32.xlu0 %v829, 64
  %v832 = vpop.permute.xlu0 %831
  %v834 = vmul.f32 %v817, %v832
  %v835 = vld [vmem:[#allocation2 + $0x18] sm:$0xff]
  %837 = vrot.lane.b32.xlu0 %v667, 32
  %v838 = vpop.permute.xlu0 %837
  %v839 = vsel %vm214, %v838, 0
  %841 = vmatprep.subr.mxu0 0.0
  %842 = vmatpush1.msra.mxu0 0.0
  %843 = vmatprep.subr.mxu0 0.0
  %844 = vmatpush1.msra.mxu0 0.0
  %845 = vmatprep.subr.mxu0 0.0
  %846 = vmatpush1.msra.mxu0 0.0
  %847 = vmatprep.subr.mxu0 0.0
  %848 = vmatpush1.msra.mxu0 0.0
  %849 = vmatprep.subr.mxu0 0.0
  %850 = vmatpush1.msra.mxu0 0.0
  %851 = vmatprep.subr.mxu0 0.0
  %852 = vmatpush1.msra.mxu0 0.0
  %853 = vmatprep.subr.mxu0 0.0
  %854 = vmatpush1.msra.mxu0 0.0
  %855 = vmatprep.subr.mxu0 0.0
  %856 = vmatpush1.msra.mxu0 0.0
  %857 = vmatprep.subr.mxu0 0.0
  %858 = vmatpush1.msra.mxu0 0.0
  %859 = vmatprep.subr.mxu0 0.0
  %860 = vmatpush1.msra.mxu0 0.0
  %861 = vmatprep.subr.mxu0 0.0
  %862 = vmatpush1.msra.mxu0 0.0
  %863 = vmatprep.subr.mxu0 0.0
  %864 = vmatpush1.msra.mxu0 0.0
  %865 = vmatprep.subr.mxu0 0.0
  %866 = vmatpush1.msra.mxu0 %v190
  %867 = vmatprep.subr.mxu0 0.0
  %868 = vmatpush1.msra.mxu0 %v189
  %869 = vmatprep.subr.mxu0 0.0
  %870 = vmatpush1.msra.mxu0 %v188
  %871 = vmatprep.subr.mxu0 0.0
  %872 = vmatpush1.msra.mxu0 %v187
  %873 = vmatprep.subr.mxu0 0.0
  %874 = vmatpush2.msra.mxu0 0.0
  %875 = vmatprep.subr.mxu0 0.0
  %876 = vmatpush2.msra.mxu0 0.0
  %877 = vmatprep.subr.mxu0 0.0
  %878 = vmatpush2.msra.mxu0 0.0
  %879 = vmatprep.subr.mxu0 0.0
  %880 = vmatpush2.msra.mxu0 0.0
  %881 = vmatprep.subr.mxu0 0.0
  %882 = vmatpush2.msra.mxu0 0.0
  %883 = vmatprep.subr.mxu0 0.0
  %884 = vmatpush2.msra.mxu0 0.0
  %885 = vmatprep.subr.mxu0 0.0
  %886 = vmatpush2.msra.mxu0 0.0
  %887 = vmatprep.subr.mxu0 0.0
  %888 = vmatpush2.msra.mxu0 0.0
  %889 = vmatprep.subr.mxu0 0.0
  %890 = vmatpush2.msra.mxu0 0.0
  %891 = vmatprep.subr.mxu0 0.0
  %892 = vmatpush2.msra.mxu0 0.0
  %893 = vmatprep.subr.mxu0 0.0
  %894 = vmatpush2.msra.mxu0 0.0
  %895 = vmatprep.subr.mxu0 0.0
  %896 = vmatpush2.msra.mxu0 0.0
  %897 = vmatprep.subr.mxu0 0.0
  %898 = vmatpush2.msra.mxu0 0.0
  %899 = vmatprep.subr.mxu0 0.0
  %900 = vmatpush2.msra.mxu0 0.0
  %901 = vmatprep.subr.mxu0 0.0
  %902 = vmatpush2.msra.mxu0 0.0
  %903 = vmatprep.subr.mxu0 0.0
  %904 = vmatpush2.msra.mxu0 0.0
  %905 = vmatprep.mubr.f32.mxu0 0.0
  %906 = vmatmul.mubr.f32.gmra.mxu0 %v839
  %v907 = vpop.f32.mrf.mxu0
  %v908 = vadd.f32 0.0, %v907
  %v909 = vpop.f32.mrf.mxu0
  %910 = vdwg.mxu0
  %v911 = vadd.f32 %v835, %v908
  %v912 = vmul.f32 %v911, %v211
  %v913 = vtanh.pop %v912
  %v914 = vmul.f32 %v913, %v211
  %v915 = vadd.f32 %v914, %v212
  %v916 = vmul.f32 %v915, %v661
  %918 = vrot.lane.b32.xlu0 %v915, 64
  %v919 = vpop.permute.xlu0 %918
  %v921 = vmul.f32 %v915, %v919
  %923 = vrot.lane.b32.xlu0 %v921, 32
  %v924 = vpop.permute.xlu0 %923
  %v926 = vadd.f32 %v916, %v924
  %v927 = vtanh.pop %v926
  %929 = vrot.lane.b32.xlu0 %v927, 64
  %v930 = vpop.permute.xlu0 %929
  %v932 = vmul.f32 %v915, %v930
  %934 = vrot.lane.b32.xlu0 %v834, 32
  %v935 = vpop.permute.xlu0 %934
  %v936 = vsel %vm214, %v935, 0
  %938 = vmatprep.subr.mxu0 0.0
  %939 = vmatpush1.msra.mxu0 0.0
  %940 = vmatprep.subr.mxu0 0.0
  %941 = vmatpush1.msra.mxu0 0.0
  %942 = vmatprep.subr.mxu0 0.0
  %943 = vmatpush1.msra.mxu0 0.0
  %944 = vmatprep.subr.mxu0 0.0
  %945 = vmatpush1.msra.mxu0 0.0
  %946 = vmatprep.subr.mxu0 0.0
  %947 = vmatpush1.msra.mxu0 0.0
  %948 = vmatprep.subr.mxu0 0.0
  %949 = vmatpush1.msra.mxu0 0.0
  %950 = vmatprep.subr.mxu0 0.0
  %951 = vmatpush1.msra.mxu0 0.0
  %952 = vmatprep.subr.mxu0 0.0
  %953 = vmatpush1.msra.mxu0 0.0
  %954 = vmatprep.subr.mxu0 0.0
  %955 = vmatpush1.msra.mxu0 0.0
  %956 = vmatprep.subr.mxu0 0.0
  %957 = vmatpush1.msra.mxu0 0.0
  %958 = vmatprep.subr.mxu0 0.0
  %959 = vmatpush1.msra.mxu0 0.0
  %960 = vmatprep.subr.mxu0 0.0
  %961 = vmatpush1.msra.mxu0 0.0
  %962 = vmatprep.subr.mxu0 0.0
  %963 = vmatpush1.msra.mxu0 %v198
  %964 = vmatprep.subr.mxu0 0.0
  %965 = vmatpush1.msra.mxu0 %v197
  %966 = vmatprep.subr.mxu0 0.0
  %967 = vmatpush1.msra.mxu0 %v196
  %968 = vmatprep.subr.mxu0 0.0
  %969 = vmatpush1.msra.mxu0 %v195
  %970 = vmatprep.subr.mxu0 0.0
  %971 = vmatpush2.msra.mxu0 0.0
  %972 = vmatprep.subr.mxu0 0.0
  %973 = vmatpush2.msra.mxu0 0.0
  %974 = vmatprep.subr.mxu0 0.0
  %975 = vmatpush2.msra.mxu0 0.0
  %976 = vmatprep.subr.mxu0 0.0
  %977 = vmatpush2.msra.mxu0 0.0
  %978 = vmatprep.subr.mxu0 0.0
  %979 = vmatpush2.msra.mxu0 0.0
  %980 = vmatprep.subr.mxu0 0.0
  %981 = vmatpush2.msra.mxu0 0.0
  %982 = vmatprep.subr.mxu0 0.0
  %983 = vmatpush2.msra.mxu0 0.0
  %984 = vmatprep.subr.mxu0 0.0
  %985 = vmatpush2.msra.mxu0 0.0
  %986 = vmatprep.subr.mxu0 0.0
  %987 = vmatpush2.msra.mxu0 0.0
  %988 = vmatprep.subr.mxu0 0.0
  %989 = vmatpush2.msra.mxu0 0.0
  %990 = vmatprep.subr.mxu0 0.0
  %991 = vmatpush2.msra.mxu0 0.0
  %992 = vmatprep.subr.mxu0 0.0
  %993 = vmatpush2.msra.mxu0 0.0
  %994 = vmatprep.subr.mxu0 0.0
  %995 = vmatpush2.msra.mxu0 0.0
  %996 = vmatprep.subr.mxu0 0.0
  %997 = vmatpush2.msra.mxu0 0.0
  %998 = vmatprep.subr.mxu0 0.0
  %999 = vmatpush2.msra.mxu0 0.0
  %1000 = vmatprep.subr.mxu0 0.0
  %1001 = vmatpush2.msra.mxu0 0.0
  %1002 = vmatprep.mubr.f32.mxu0 0.0
  %1003 = vmatmul.mubr.f32.gmra.mxu0 %v936
  %v1004 = vpop.f32.mrf.mxu0
  %v1005 = vadd.f32 0.0, %v1004
  %v1006 = vpop.f32.mrf.mxu0
  %1007 = vdwg.mxu0
  %1008 = vmatprep.subr.mxu0 0.0
  %1009 = vmatpush1.msra.mxu0 0.0
  %1010 = vmatprep.subr.mxu0 0.0
  %1011 = vmatpush1.msra.mxu0 0.0
  %1012 = vmatprep.subr.mxu0 0.0
  %1013 = vmatpush1.msra.mxu0 0.0
  %1014 = vmatprep.subr.mxu0 0.0
  %1015 = vmatpush1.msra.mxu0 0.0
  %1016 = vmatprep.subr.mxu0 0.0
  %1017 = vmatpush1.msra.mxu0 0.0
  %1018 = vmatprep.subr.mxu0 0.0
  %1019 = vmatpush1.msra.mxu0 0.0
  %1020 = vmatprep.subr.mxu0 0.0
  %1021 = vmatpush1.msra.mxu0 0.0
  %1022 = vmatprep.subr.mxu0 0.0
  %1023 = vmatpush1.msra.mxu0 0.0
  %1024 = vmatprep.subr.mxu0 0.0
  %1025 = vmatpush1.msra.mxu0 0.0
  %1026 = vmatprep.subr.mxu0 0.0
  %1027 = vmatpush1.msra.mxu0 0.0
  %1028 = vmatprep.subr.mxu0 0.0
  %1029 = vmatpush1.msra.mxu0 0.0
  %1030 = vmatprep.subr.mxu0 0.0
  %1031 = vmatpush1.msra.mxu0 0.0
  %1032 = vmatprep.subr.mxu0 0.0
  %1033 = vmatpush1.msra.mxu0 %v194
  %1034 = vmatprep.subr.mxu0 0.0
  %1035 = vmatpush1.msra.mxu0 %v193
  %1036 = vmatprep.subr.mxu0 0.0
  %1037 = vmatpush1.msra.mxu0 %v192
  %1038 = vmatprep.subr.mxu0 0.0
  %1039 = vmatpush1.msra.mxu0 %v191
  %1040 = vmatprep.subr.mxu0 0.0
  %1041 = vmatpush2.msra.mxu0 0.0
  %1042 = vmatprep.subr.mxu0 0.0
  %1043 = vmatpush2.msra.mxu0 0.0
  %1044 = vmatprep.subr.mxu0 0.0
  %1045 = vmatpush2.msra.mxu0 0.0
  %1046 = vmatprep.subr.mxu0 0.0
  %1047 = vmatpush2.msra.mxu0 0.0
  %1048 = vmatprep.subr.mxu0 0.0
  %1049 = vmatpush2.msra.mxu0 0.0
  %1050 = vmatprep.subr.mxu0 0.0
  %1051 = vmatpush2.msra.mxu0 0.0
  %1052 = vmatprep.subr.mxu0 0.0
  %1053 = vmatpush2.msra.mxu0 0.0
  %1054 = vmatprep.subr.mxu0 0.0
  %1055 = vmatpush2.msra.mxu0 0.0
  %1056 = vmatprep.subr.mxu0 0.0
  %1057 = vmatpush2.msra.mxu0 0.0
  %1058 = vmatprep.subr.mxu0 0.0
  %1059 = vmatpush2.msra.mxu0 0.0
  %1060 = vmatprep.subr.mxu0 0.0
  %1061 = vmatpush2.msra.mxu0 0.0
  %1062 = vmatprep.subr.mxu0 0.0
  %1063 = vmatpush2.msra.mxu0 0.0
  %1064 = vmatprep.subr.mxu0 0.0
  %1065 = vmatpush2.msra.mxu0 0.0
  %1066 = vmatprep.subr.mxu0 0.0
  %1067 = vmatpush2.msra.mxu0 0.0
  %1068 = vmatprep.subr.mxu0 0.0
  %1069 = vmatpush2.msra.mxu0 0.0
  %1070 = vmatprep.subr.mxu0 0.0
  %1071 = vmatpush2.msra.mxu0 0.0
  %1072 = vmatprep.mubr.f32.mxu0 0.0
  %1073 = vmatmul.mubr.f32.gmra.mxu0 %v839
  %v1074 = vpop.f32.mrf.mxu0
  %v1075 = vadd.f32 %v1005, %v1074
  %v1076 = vpop.f32.mrf.mxu0
  %1077 = vdwg.mxu0
  %v1078 = vadd.f32 %v1075, %v204
  %v1079 = vmul.f32 %v1078, %v211
  %v1080 = vtanh.pop %v1079
  %v1081 = vmul.f32 %v1080, %v211
  %v1082 = vadd.f32 %v1081, %v212
  %v1083 = vmul.f32 %v1082, %v828
  %1085 = vrot.lane.b32.xlu0 %v1082, 64
  %v1086 = vpop.permute.xlu0 %1085
  %v1088 = vmul.f32 %v1082, %v1086
  %1090 = vrot.lane.b32.xlu0 %v1088, 32
  %v1091 = vpop.permute.xlu0 %1090
  %v1093 = vadd.f32 %v1083, %v1091
  %v1094 = vtanh.pop %v1093
  %1096 = vrot.lane.b32.xlu0 %v1094, 64
  %v1097 = vpop.permute.xlu0 %1096
  %v1099 = vmul.f32 %v1082, %v1097
  %v1100 = vld [vmem:[#allocation2 + $0x20] sm:$0xff]
  %1102 = vrot.lane.b32.xlu0 %v932, 32
  %v1103 = vpop.permute.xlu0 %1102
  %v1104 = vsel %vm214, %v1103, 0
  %1106 = vmatprep.subr.mxu0 0.0
  %1107 = vmatpush1.msra.mxu0 0.0
  %1108 = vmatprep.subr.mxu0 0.0
  %1109 = vmatpush1.msra.mxu0 0.0
  %1110 = vmatprep.subr.mxu0 0.0
  %1111 = vmatpush1.msra.mxu0 0.0
  %1112 = vmatprep.subr.mxu0 0.0
  %1113 = vmatpush1.msra.mxu0 0.0
  %1114 = vmatprep.subr.mxu0 0.0
  %1115 = vmatpush1.msra.mxu0 0.0
  %1116 = vmatprep.subr.mxu0 0.0
  %1117 = vmatpush1.msra.mxu0 0.0
  %1118 = vmatprep.subr.mxu0 0.0
  %1119 = vmatpush1.msra.mxu0 0.0
  %1120 = vmatprep.subr.mxu0 0.0
  %1121 = vmatpush1.msra.mxu0 0.0
  %1122 = vmatprep.subr.mxu0 0.0
  %1123 = vmatpush1.msra.mxu0 0.0
  %1124 = vmatprep.subr.mxu0 0.0
  %1125 = vmatpush1.msra.mxu0 0.0
  %1126 = vmatprep.subr.mxu0 0.0
  %1127 = vmatpush1.msra.mxu0 0.0
  %1128 = vmatprep.subr.mxu0 0.0
  %1129 = vmatpush1.msra.mxu0 0.0
  %1130 = vmatprep.subr.mxu0 0.0
  %1131 = vmatpush1.msra.mxu0 %v190
  %1132 = vmatprep.subr.mxu0 0.0
  %1133 = vmatpush1.msra.mxu0 %v189
  %1134 = vmatprep.subr.mxu0 0.0
  %1135 = vmatpush1.msra.mxu0 %v188
  %1136 = vmatprep.subr.mxu0 0.0
  %1137 = vmatpush1.msra.mxu0 %v187
  %1138 = vmatprep.subr.mxu0 0.0
  %1139 = vmatpush2.msra.mxu0 0.0
  %1140 = vmatprep.subr.mxu0 0.0
  %1141 = vmatpush2.msra.mxu0 0.0
  %1142 = vmatprep.subr.mxu0 0.0
  %1143 = vmatpush2.msra.mxu0 0.0
  %1144 = vmatprep.subr.mxu0 0.0
  %1145 = vmatpush2.msra.mxu0 0.0
  %1146 = vmatprep.subr.mxu0 0.0
  %1147 = vmatpush2.msra.mxu0 0.0
  %1148 = vmatprep.subr.mxu0 0.0
  %1149 = vmatpush2.msra.mxu0 0.0
  %1150 = vmatprep.subr.mxu0 0.0
  %1151 = vmatpush2.msra.mxu0 0.0
  %1152 = vmatprep.subr.mxu0 0.0
  %1153 = vmatpush2.msra.mxu0 0.0
  %1154 = vmatprep.subr.mxu0 0.0
  %1155 = vmatpush2.msra.mxu0 0.0
  %1156 = vmatprep.subr.mxu0 0.0
  %1157 = vmatpush2.msra.mxu0 0.0
  %1158 = vmatprep.subr.mxu0 0.0
  %1159 = vmatpush2.msra.mxu0 0.0
  %1160 = vmatprep.subr.mxu0 0.0
  %1161 = vmatpush2.msra.mxu0 0.0
  %1162 = vmatprep.subr.mxu0 0.0
  %1163 = vmatpush2.msra.mxu0 0.0
  %1164 = vmatprep.subr.mxu0 0.0
  %1165 = vmatpush2.msra.mxu0 0.0
  %1166 = vmatprep.subr.mxu0 0.0
  %1167 = vmatpush2.msra.mxu0 0.0
  %1168 = vmatprep.subr.mxu0 0.0
  %1169 = vmatpush2.msra.mxu0 0.0
  %1170 = vmatprep.mubr.f32.mxu0 0.0
  %1171 = vmatmul.mubr.f32.gmra.mxu0 %v1104
  %v1172 = vpop.f32.mrf.mxu0
  %v1173 = vadd.f32 0.0, %v1172
  %v1174 = vpop.f32.mrf.mxu0
  %1175 = vdwg.mxu0
  %v1176 = vadd.f32 %v1100, %v1173
  %v1177 = vmul.f32 %v1176, %v211
  %v1178 = vtanh.pop %v1177
  %v1179 = vmul.f32 %v1178, %v211
  %v1180 = vadd.f32 %v1179, %v212
  %v1181 = vmul.f32 %v1180, %v926
  %1183 = vrot.lane.b32.xlu0 %v1180, 64
  %v1184 = vpop.permute.xlu0 %1183
  %v1186 = vmul.f32 %v1180, %v1184
  %1188 = vrot.lane.b32.xlu0 %v1186, 32
  %v1189 = vpop.permute.xlu0 %1188
  %v1191 = vadd.f32 %v1181, %v1189
  %v1192 = vtanh.pop %v1191
  %1194 = vrot.lane.b32.xlu0 %v1192, 64
  %v1195 = vpop.permute.xlu0 %1194
  %v1197 = vmul.f32 %v1180, %v1195
  %1199 = vrot.lane.b32.xlu0 %v1099, 32
  %v1200 = vpop.permute.xlu0 %1199
  %v1201 = vsel %vm214, %v1200, 0
  %1203 = vmatprep.subr.mxu0 0.0
  %1204 = vmatpush1.msra.mxu0 0.0
  %1205 = vmatprep.subr.mxu0 0.0
  %1206 = vmatpush1.msra.mxu0 0.0
  %1207 = vmatprep.subr.mxu0 0.0
  %1208 = vmatpush1.msra.mxu0 0.0
  %1209 = vmatprep.subr.mxu0 0.0
  %1210 = vmatpush1.msra.mxu0 0.0
  %1211 = vmatprep.subr.mxu0 0.0
  %1212 = vmatpush1.msra.mxu0 0.0
  %1213 = vmatprep.subr.mxu0 0.0
  %1214 = vmatpush1.msra.mxu0 0.0
  %1215 = vmatprep.subr.mxu0 0.0
  %1216 = vmatpush1.msra.mxu0 0.0
  %1217 = vmatprep.subr.mxu0 0.0
  %1218 = vmatpush1.msra.mxu0 0.0
  %1219 = vmatprep.subr.mxu0 0.0
  %1220 = vmatpush1.msra.mxu0 0.0
  %1221 = vmatprep.subr.mxu0 0.0
  %1222 = vmatpush1.msra.mxu0 0.0
  %1223 = vmatprep.subr.mxu0 0.0
  %1224 = vmatpush1.msra.mxu0 0.0
  %1225 = vmatprep.subr.mxu0 0.0
  %1226 = vmatpush1.msra.mxu0 0.0
  %1227 = vmatprep.subr.mxu0 0.0
  %1228 = vmatpush1.msra.mxu0 %v198
  %1229 = vmatprep.subr.mxu0 0.0
  %1230 = vmatpush1.msra.mxu0 %v197
  %1231 = vmatprep.subr.mxu0 0.0
  %1232 = vmatpush1.msra.mxu0 %v196
  %1233 = vmatprep.subr.mxu0 0.0
  %1234 = vmatpush1.msra.mxu0 %v195
  %1235 = vmatprep.subr.mxu0 0.0
  %1236 = vmatpush2.msra.mxu0 0.0
  %1237 = vmatprep.subr.mxu0 0.0
  %1238 = vmatpush2.msra.mxu0 0.0
  %1239 = vmatprep.subr.mxu0 0.0
  %1240 = vmatpush2.msra.mxu0 0.0
  %1241 = vmatprep.subr.mxu0 0.0
  %1242 = vmatpush2.msra.mxu0 0.0
  %1243 = vmatprep.subr.mxu0 0.0
  %1244 = vmatpush2.msra.mxu0 0.0
  %1245 = vmatprep.subr.mxu0 0.0
  %1246 = vmatpush2.msra.mxu0 0.0
  %1247 = vmatprep.subr.mxu0 0.0
  %1248 = vmatpush2.msra.mxu0 0.0
  %1249 = vmatprep.subr.mxu0 0.0
  %1250 = vmatpush2.msra.mxu0 0.0
  %1251 = vmatprep.subr.mxu0 0.0
  %1252 = vmatpush2.msra.mxu0 0.0
  %1253 = vmatprep.subr.mxu0 0.0
  %1254 = vmatpush2.msra.mxu0 0.0
  %1255 = vmatprep.subr.mxu0 0.0
  %1256 = vmatpush2.msra.mxu0 0.0
  %1257 = vmatprep.subr.mxu0 0.0
  %1258 = vmatpush2.msra.mxu0 0.0
  %1259 = vmatprep.subr.mxu0 0.0
  %1260 = vmatpush2.msra.mxu0 0.0
  %1261 = vmatprep.subr.mxu0 0.0
  %1262 = vmatpush2.msra.mxu0 0.0
  %1263 = vmatprep.subr.mxu0 0.0
  %1264 = vmatpush2.msra.mxu0 0.0
  %1265 = vmatprep.subr.mxu0 0.0
  %1266 = vmatpush2.msra.mxu0 0.0
  %1267 = vmatprep.mubr.f32.mxu0 0.0
  %1268 = vmatmul.mubr.f32.gmra.mxu0 %v1201
  %v1269 = vpop.f32.mrf.mxu0
  %v1270 = vadd.f32 0.0, %v1269
  %v1271 = vpop.f32.mrf.mxu0
  %1272 = vdwg.mxu0
  %1273 = vmatprep.subr.mxu0 0.0
  %1274 = vmatpush1.msra.mxu0 0.0
  %1275 = vmatprep.subr.mxu0 0.0
  %1276 = vmatpush1.msra.mxu0 0.0
  %1277 = vmatprep.subr.mxu0 0.0
  %1278 = vmatpush1.msra.mxu0 0.0
  %1279 = vmatprep.subr.mxu0 0.0
  %1280 = vmatpush1.msra.mxu0 0.0
  %1281 = vmatprep.subr.mxu0 0.0
  %1282 = vmatpush1.msra.mxu0 0.0
  %1283 = vmatprep.subr.mxu0 0.0
  %1284 = vmatpush1.msra.mxu0 0.0
  %1285 = vmatprep.subr.mxu0 0.0
  %1286 = vmatpush1.msra.mxu0 0.0
  %1287 = vmatprep.subr.mxu0 0.0
  %1288 = vmatpush1.msra.mxu0 0.0
  %1289 = vmatprep.subr.mxu0 0.0
  %1290 = vmatpush1.msra.mxu0 0.0
  %1291 = vmatprep.subr.mxu0 0.0
  %1292 = vmatpush1.msra.mxu0 0.0
  %1293 = vmatprep.subr.mxu0 0.0
  %1294 = vmatpush1.msra.mxu0 0.0
  %1295 = vmatprep.subr.mxu0 0.0
  %1296 = vmatpush1.msra.mxu0 0.0
  %1297 = vmatprep.subr.mxu0 0.0
  %1298 = vmatpush1.msra.mxu0 %v194
  %1299 = vmatprep.subr.mxu0 0.0
  %1300 = vmatpush1.msra.mxu0 %v193
  %1301 = vmatprep.subr.mxu0 0.0
  %1302 = vmatpush1.msra.mxu0 %v192
  %1303 = vmatprep.subr.mxu0 0.0
  %1304 = vmatpush1.msra.mxu0 %v191
  %1305 = vmatprep.subr.mxu0 0.0
  %1306 = vmatpush2.msra.mxu0 0.0
  %1307 = vmatprep.subr.mxu0 0.0
  %1308 = vmatpush2.msra.mxu0 0.0
  %1309 = vmatprep.subr.mxu0 0.0
  %1310 = vmatpush2.msra.mxu0 0.0
  %1311 = vmatprep.subr.mxu0 0.0
  %1312 = vmatpush2.msra.mxu0 0.0
  %1313 = vmatprep.subr.mxu0 0.0
  %1314 = vmatpush2.msra.mxu0 0.0
  %1315 = vmatprep.subr.mxu0 0.0
  %1316 = vmatpush2.msra.mxu0 0.0
  %1317 = vmatprep.subr.mxu0 0.0
  %1318 = vmatpush2.msra.mxu0 0.0
  %1319 = vmatprep.subr.mxu0 0.0
  %1320 = vmatpush2.msra.mxu0 0.0
  %1321 = vmatprep.subr.mxu0 0.0
  %1322 = vmatpush2.msra.mxu0 0.0
  %1323 = vmatprep.subr.mxu0 0.0
  %1324 = vmatpush2.msra.mxu0 0.0
  %1325 = vmatprep.subr.mxu0 0.0
  %1326 = vmatpush2.msra.mxu0 0.0
  %1327 = vmatprep.subr.mxu0 0.0
  %1328 = vmatpush2.msra.mxu0 0.0
  %1329 = vmatprep.subr.mxu0 0.0
  %1330 = vmatpush2.msra.mxu0 0.0
  %1331 = vmatprep.subr.mxu0 0.0
  %1332 = vmatpush2.msra.mxu0 0.0
  %1333 = vmatprep.subr.mxu0 0.0
  %1334 = vmatpush2.msra.mxu0 0.0
  %1335 = vmatprep.subr.mxu0 0.0
  %1336 = vmatpush2.msra.mxu0 0.0
  %1337 = vmatprep.mubr.f32.mxu0 0.0
  %1338 = vmatmul.mubr.f32.gmra.mxu0 %v1104
  %v1339 = vpop.f32.mrf.mxu0
  %v1340 = vadd.f32 %v1270, %v1339
  %v1341 = vpop.f32.mrf.mxu0
  %1342 = vdwg.mxu0
  %v1343 = vadd.f32 %v1340, %v204
  %v1344 = vmul.f32 %v1343, %v211
  %v1345 = vtanh.pop %v1344
  %v1346 = vmul.f32 %v1345, %v211
  %v1347 = vadd.f32 %v1346, %v212
  %v1348 = vmul.f32 %v1347, %v1093
  %1350 = vrot.lane.b32.xlu0 %v1347, 64
  %v1351 = vpop.permute.xlu0 %1350
  %v1353 = vmul.f32 %v1347, %v1351
  %1355 = vrot.lane.b32.xlu0 %v1353, 32
  %v1356 = vpop.permute.xlu0 %1355
  %v1358 = vadd.f32 %v1348, %v1356
  %v1359 = vtanh.pop %v1358
  %1361 = vrot.lane.b32.xlu0 %v1359, 64
  %v1362 = vpop.permute.xlu0 %1361
  %v1364 = vmul.f32 %v1347, %v1362
  %v1365 = vld [vmem:[#allocation2 + $0x28] sm:$0xff]
  %1367 = vrot.lane.b32.xlu0 %v1197, 32
  %v1368 = vpop.permute.xlu0 %1367
  %v1369 = vsel %vm214, %v1368, 0
  %1371 = vmatprep.subr.mxu0 0.0
  %1372 = vmatpush1.msra.mxu0 0.0
  %1373 = vmatprep.subr.mxu0 0.0
  %1374 = vmatpush1.msra.mxu0 0.0
  %1375 = vmatprep.subr.mxu0 0.0
  %1376 = vmatpush1.msra.mxu0 0.0
  %1377 = vmatprep.subr.mxu0 0.0
  %1378 = vmatpush1.msra.mxu0 0.0
  %1379 = vmatprep.subr.mxu0 0.0
  %1380 = vmatpush1.msra.mxu0 0.0
  %1381 = vmatprep.subr.mxu0 0.0
  %1382 = vmatpush1.msra.mxu0 0.0
  %1383 = vmatprep.subr.mxu0 0.0
  %1384 = vmatpush1.msra.mxu0 0.0
  %1385 = vmatprep.subr.mxu0 0.0
  %1386 = vmatpush1.msra.mxu0 0.0
  %1387 = vmatprep.subr.mxu0 0.0
  %1388 = vmatpush1.msra.mxu0 0.0
  %1389 = vmatprep.subr.mxu0 0.0
  %1390 = vmatpush1.msra.mxu0 0.0
  %1391 = vmatprep.subr.mxu0 0.0
  %1392 = vmatpush1.msra.mxu0 0.0
  %1393 = vmatprep.subr.mxu0 0.0
  %1394 = vmatpush1.msra.mxu0 0.0
  %1395 = vmatprep.subr.mxu0 0.0
  %1396 = vmatpush1.msra.mxu0 %v190
  %1397 = vmatprep.subr.mxu0 0.0
  %1398 = vmatpush1.msra.mxu0 %v189
  %1399 = vmatprep.subr.mxu0 0.0
  %1400 = vmatpush1.msra.mxu0 %v188
  %1401 = vmatprep.subr.mxu0 0.0
  %1402 = vmatpush1.msra.mxu0 %v187
  %1403 = vmatprep.subr.mxu0 0.0
  %1404 = vmatpush2.msra.mxu0 0.0
  %1405 = vmatprep.subr.mxu0 0.0
  %1406 = vmatpush2.msra.mxu0 0.0
  %1407 = vmatprep.subr.mxu0 0.0
  %1408 = vmatpush2.msra.mxu0 0.0
  %1409 = vmatprep.subr.mxu0 0.0
  %1410 = vmatpush2.msra.mxu0 0.0
  %1411 = vmatprep.subr.mxu0 0.0
  %1412 = vmatpush2.msra.mxu0 0.0
  %1413 = vmatprep.subr.mxu0 0.0
  %1414 = vmatpush2.msra.mxu0 0.0
  %1415 = vmatprep.subr.mxu0 0.0
  %1416 = vmatpush2.msra.mxu0 0.0
  %1417 = vmatprep.subr.mxu0 0.0
  %1418 = vmatpush2.msra.mxu0 0.0
  %1419 = vmatprep.subr.mxu0 0.0
  %1420 = vmatpush2.msra.mxu0 0.0
  %1421 = vmatprep.subr.mxu0 0.0
  %1422 = vmatpush2.msra.mxu0 0.0
  %1423 = vmatprep.subr.mxu0 0.0
  %1424 = vmatpush2.msra.mxu0 0.0
  %1425 = vmatprep.subr.mxu0 0.0
  %1426 = vmatpush2.msra.mxu0 0.0
  %1427 = vmatprep.subr.mxu0 0.0
  %1428 = vmatpush2.msra.mxu0 0.0
  %1429 = vmatprep.subr.mxu0 0.0
  %1430 = vmatpush2.msra.mxu0 0.0
  %1431 = vmatprep.subr.mxu0 0.0
  %1432 = vmatpush2.msra.mxu0 0.0
  %1433 = vmatprep.subr.mxu0 0.0
  %1434 = vmatpush2.msra.mxu0 0.0
  %1435 = vmatprep.mubr.f32.mxu0 0.0
  %1436 = vmatmul.mubr.f32.gmra.mxu0 %v1369
  %v1437 = vpop.f32.mrf.mxu0
  %v1438 = vadd.f32 0.0, %v1437
  %v1439 = vpop.f32.mrf.mxu0
  %1440 = vdwg.mxu0
  %v1441 = vadd.f32 %v1365, %v1438
  %v1442 = vmul.f32 %v1441, %v211
  %v1443 = vtanh.pop %v1442
  %v1444 = vmul.f32 %v1443, %v211
  %v1445 = vadd.f32 %v1444, %v212
  %v1446 = vmul.f32 %v1445, %v1191
  %1448 = vrot.lane.b32.xlu0 %v1445, 64
  %v1449 = vpop.permute.xlu0 %1448
  %v1451 = vmul.f32 %v1445, %v1449
  %1453 = vrot.lane.b32.xlu0 %v1451, 32
  %v1454 = vpop.permute.xlu0 %1453
  %v1456 = vadd.f32 %v1446, %v1454
  %v1457 = vtanh.pop %v1456
  %1459 = vrot.lane.b32.xlu0 %v1457, 64
  %v1460 = vpop.permute.xlu0 %1459
  %v1462 = vmul.f32 %v1445, %v1460
  %1464 = vrot.lane.b32.xlu0 %v1364, 32
  %v1465 = vpop.permute.xlu0 %1464
  %v1466 = vsel %vm214, %v1465, 0
  %1468 = vmatprep.subr.mxu0 0.0
  %1469 = vmatpush1.msra.mxu0 0.0
  %1470 = vmatprep.subr.mxu0 0.0
  %1471 = vmatpush1.msra.mxu0 0.0
  %1472 = vmatprep.subr.mxu0 0.0
  %1473 = vmatpush1.msra.mxu0 0.0
  %1474 = vmatprep.subr.mxu0 0.0
  %1475 = vmatpush1.msra.mxu0 0.0
  %1476 = vmatprep.subr.mxu0 0.0
  %1477 = vmatpush1.msra.mxu0 0.0
  %1478 = vmatprep.subr.mxu0 0.0
  %1479 = vmatpush1.msra.mxu0 0.0
  %1480 = vmatprep.subr.mxu0 0.0
  %1481 = vmatpush1.msra.mxu0 0.0
  %1482 = vmatprep.subr.mxu0 0.0
  %1483 = vmatpush1.msra.mxu0 0.0
  %1484 = vmatprep.subr.mxu0 0.0
  %1485 = vmatpush1.msra.mxu0 0.0
  %1486 = vmatprep.subr.mxu0 0.0
  %1487 = vmatpush1.msra.mxu0 0.0
  %1488 = vmatprep.subr.mxu0 0.0
  %1489 = vmatpush1.msra.mxu0 0.0
  %1490 = vmatprep.subr.mxu0 0.0
  %1491 = vmatpush1.msra.mxu0 0.0
  %1492 = vmatprep.subr.mxu0 0.0
  %1493 = vmatpush1.msra.mxu0 %v198
  %1494 = vmatprep.subr.mxu0 0.0
  %1495 = vmatpush1.msra.mxu0 %v197
  %1496 = vmatprep.subr.mxu0 0.0
  %1497 = vmatpush1.msra.mxu0 %v196
  %1498 = vmatprep.subr.mxu0 0.0
  %1499 = vmatpush1.msra.mxu0 %v195
  %1500 = vmatprep.subr.mxu0 0.0
  %1501 = vmatpush2.msra.mxu0 0.0
  %1502 = vmatprep.subr.mxu0 0.0
  %1503 = vmatpush2.msra.mxu0 0.0
  %1504 = vmatprep.subr.mxu0 0.0
  %1505 = vmatpush2.msra.mxu0 0.0
  %1506 = vmatprep.subr.mxu0 0.0
  %1507 = vmatpush2.msra.mxu0 0.0
  %1508 = vmatprep.subr.mxu0 0.0
  %1509 = vmatpush2.msra.mxu0 0.0
  %1510 = vmatprep.subr.mxu0 0.0
  %1511 = vmatpush2.msra.mxu0 0.0
  %1512 = vmatprep.subr.mxu0 0.0
  %1513 = vmatpush2.msra.mxu0 0.0
  %1514 = vmatprep.subr.mxu0 0.0
  %1515 = vmatpush2.msra.mxu0 0.0
  %1516 = vmatprep.subr.mxu0 0.0
  %1517 = vmatpush2.msra.mxu0 0.0
  %1518 = vmatprep.subr.mxu0 0.0
  %1519 = vmatpush2.msra.mxu0 0.0
  %1520 = vmatprep.subr.mxu0 0.0
  %1521 = vmatpush2.msra.mxu0 0.0
  %1522 = vmatprep.subr.mxu0 0.0
  %1523 = vmatpush2.msra.mxu0 0.0
  %1524 = vmatprep.subr.mxu0 0.0
  %1525 = vmatpush2.msra.mxu0 0.0
  %1526 = vmatprep.subr.mxu0 0.0
  %1527 = vmatpush2.msra.mxu0 0.0
  %1528 = vmatprep.subr.mxu0 0.0
  %1529 = vmatpush2.msra.mxu0 0.0
  %1530 = vmatprep.subr.mxu0 0.0
  %1531 = vmatpush2.msra.mxu0 0.0
  %1532 = vmatprep.mubr.f32.mxu0 0.0
  %1533 = vmatmul.mubr.f32.gmra.mxu0 %v1466
  %v1534 = vpop.f32.mrf.mxu0
  %v1535 = vadd.f32 0.0, %v1534
  %v1536 = vpop.f32.mrf.mxu0
  %1537 = vdwg.mxu0
  %1538 = vmatprep.subr.mxu0 0.0
  %1539 = vmatpush1.msra.mxu0 0.0
  %1540 = vmatprep.subr.mxu0 0.0
  %1541 = vmatpush1.msra.mxu0 0.0
  %1542 = vmatprep.subr.mxu0 0.0
  %1543 = vmatpush1.msra.mxu0 0.0
  %1544 = vmatprep.subr.mxu0 0.0
  %1545 = vmatpush1.msra.mxu0 0.0
  %1546 = vmatprep.subr.mxu0 0.0
  %1547 = vmatpush1.msra.mxu0 0.0
  %1548 = vmatprep.subr.mxu0 0.0
  %1549 = vmatpush1.msra.mxu0 0.0
  %1550 = vmatprep.subr.mxu0 0.0
  %1551 = vmatpush1.msra.mxu0 0.0
  %1552 = vmatprep.subr.mxu0 0.0
  %1553 = vmatpush1.msra.mxu0 0.0
  %1554 = vmatprep.subr.mxu0 0.0
  %1555 = vmatpush1.msra.mxu0 0.0
  %1556 = vmatprep.subr.mxu0 0.0
  %1557 = vmatpush1.msra.mxu0 0.0
  %1558 = vmatprep.subr.mxu0 0.0
  %1559 = vmatpush1.msra.mxu0 0.0
  %1560 = vmatprep.subr.mxu0 0.0
  %1561 = vmatpush1.msra.mxu0 0.0
  %1562 = vmatprep.subr.mxu0 0.0
  %1563 = vmatpush1.msra.mxu0 %v194
  %1564 = vmatprep.subr.mxu0 0.0
  %1565 = vmatpush1.msra.mxu0 %v193
  %1566 = vmatprep.subr.mxu0 0.0
  %1567 = vmatpush1.msra.mxu0 %v192
  %1568 = vmatprep.subr.mxu0 0.0
  %1569 = vmatpush1.msra.mxu0 %v191
  %1570 = vmatprep.subr.mxu0 0.0
  %1571 = vmatpush2.msra.mxu0 0.0
  %1572 = vmatprep.subr.mxu0 0.0
  %1573 = vmatpush2.msra.mxu0 0.0
  %1574 = vmatprep.subr.mxu0 0.0
  %1575 = vmatpush2.msra.mxu0 0.0
  %1576 = vmatprep.subr.mxu0 0.0
  %1577 = vmatpush2.msra.mxu0 0.0
  %1578 = vmatprep.subr.mxu0 0.0
  %1579 = vmatpush2.msra.mxu0 0.0
  %1580 = vmatprep.subr.mxu0 0.0
  %1581 = vmatpush2.msra.mxu0 0.0
  %1582 = vmatprep.subr.mxu0 0.0
  %1583 = vmatpush2.msra.mxu0 0.0
  %1584 = vmatprep.subr.mxu0 0.0
  %1585 = vmatpush2.msra.mxu0 0.0
  %1586 = vmatprep.subr.mxu0 0.0
  %1587 = vmatpush2.msra.mxu0 0.0
  %1588 = vmatprep.subr.mxu0 0.0
  %1589 = vmatpush2.msra.mxu0 0.0
  %1590 = vmatprep.subr.mxu0 0.0
  %1591 = vmatpush2.msra.mxu0 0.0
  %1592 = vmatprep.subr.mxu0 0.0
  %1593 = vmatpush2.msra.mxu0 0.0
  %1594 = vmatprep.subr.mxu0 0.0
  %1595 = vmatpush2.msra.mxu0 0.0
  %1596 = vmatprep.subr.mxu0 0.0
  %1597 = vmatpush2.msra.mxu0 0.0
  %1598 = vmatprep.subr.mxu0 0.0
  %1599 = vmatpush2.msra.mxu0 0.0
  %1600 = vmatprep.subr.mxu0 0.0
  %1601 = vmatpush2.msra.mxu0 0.0
  %1602 = vmatprep.mubr.f32.mxu0 0.0
  %1603 = vmatmul.mubr.f32.gmra.mxu0 %v1369
  %v1604 = vpop.f32.mrf.mxu0
  %v1605 = vadd.f32 %v1535, %v1604
  %v1606 = vpop.f32.mrf.mxu0
  %1607 = vdwg.mxu0
  %v1608 = vadd.f32 %v1605, %v204
  %v1609 = vmul.f32 %v1608, %v211
  %v1610 = vtanh.pop %v1609
  %v1611 = vmul.f32 %v1610, %v211
  %v1612 = vadd.f32 %v1611, %v212
  %v1613 = vmul.f32 %v1612, %v1358
  %1615 = vrot.lane.b32.xlu0 %v1612, 64
  %v1616 = vpop.permute.xlu0 %1615
  %v1618 = vmul.f32 %v1612, %v1616
  %1620 = vrot.lane.b32.xlu0 %v1618, 32
  %v1621 = vpop.permute.xlu0 %1620
  %v1623 = vadd.f32 %v1613, %v1621
  %v1624 = vtanh.pop %v1623
  %1626 = vrot.lane.b32.xlu0 %v1624, 64
  %v1627 = vpop.permute.xlu0 %1626
  %v1629 = vmul.f32 %v1612, %v1627
  %v1630 = vld [vmem:[#allocation2 + $0x30] sm:$0xff]
  %1632 = vrot.lane.b32.xlu0 %v1462, 32
  %v1633 = vpop.permute.xlu0 %1632
  %v1634 = vsel %vm214, %v1633, 0
  %1636 = vmatprep.subr.mxu0 0.0
  %1637 = vmatpush1.msra.mxu0 0.0
  %1638 = vmatprep.subr.mxu0 0.0
  %1639 = vmatpush1.msra.mxu0 0.0
  %1640 = vmatprep.subr.mxu0 0.0
  %1641 = vmatpush1.msra.mxu0 0.0
  %1642 = vmatprep.subr.mxu0 0.0
  %1643 = vmatpush1.msra.mxu0 0.0
  %1644 = vmatprep.subr.mxu0 0.0
  %1645 = vmatpush1.msra.mxu0 0.0
  %1646 = vmatprep.subr.mxu0 0.0
  %1647 = vmatpush1.msra.mxu0 0.0
  %1648 = vmatprep.subr.mxu0 0.0
  %1649 = vmatpush1.msra.mxu0 0.0
  %1650 = vmatprep.subr.mxu0 0.0
  %1651 = vmatpush1.msra.mxu0 0.0
  %1652 = vmatprep.subr.mxu0 0.0
  %1653 = vmatpush1.msra.mxu0 0.0
  %1654 = vmatprep.subr.mxu0 0.0
  %1655 = vmatpush1.msra.mxu0 0.0
  %1656 = vmatprep.subr.mxu0 0.0
  %1657 = vmatpush1.msra.mxu0 0.0
  %1658 = vmatprep.subr.mxu0 0.0
  %1659 = vmatpush1.msra.mxu0 0.0
  %1660 = vmatprep.subr.mxu0 0.0
  %1661 = vmatpush1.msra.mxu0 %v190
  %1662 = vmatprep.subr.mxu0 0.0
  %1663 = vmatpush1.msra.mxu0 %v189
  %1664 = vmatprep.subr.mxu0 0.0
  %1665 = vmatpush1.msra.mxu0 %v188
  %1666 = vmatprep.subr.mxu0 0.0
  %1667 = vmatpush1.msra.mxu0 %v187
  %1668 = vmatprep.subr.mxu0 0.0
  %1669 = vmatpush2.msra.mxu0 0.0
  %1670 = vmatprep.subr.mxu0 0.0
  %1671 = vmatpush2.msra.mxu0 0.0
  %1672 = vmatprep.subr.mxu0 0.0
  %1673 = vmatpush2.msra.mxu0 0.0
  %1674 = vmatprep.subr.mxu0 0.0
  %1675 = vmatpush2.msra.mxu0 0.0
  %1676 = vmatprep.subr.mxu0 0.0
  %1677 = vmatpush2.msra.mxu0 0.0
  %1678 = vmatprep.subr.mxu0 0.0
  %1679 = vmatpush2.msra.mxu0 0.0
  %1680 = vmatprep.subr.mxu0 0.0
  %1681 = vmatpush2.msra.mxu0 0.0
  %1682 = vmatprep.subr.mxu0 0.0
  %1683 = vmatpush2.msra.mxu0 0.0
  %1684 = vmatprep.subr.mxu0 0.0
  %1685 = vmatpush2.msra.mxu0 0.0
  %1686 = vmatprep.subr.mxu0 0.0
  %1687 = vmatpush2.msra.mxu0 0.0
  %1688 = vmatprep.subr.mxu0 0.0
  %1689 = vmatpush2.msra.mxu0 0.0
  %1690 = vmatprep.subr.mxu0 0.0
  %1691 = vmatpush2.msra.mxu0 0.0
  %1692 = vmatprep.subr.mxu0 0.0
  %1693 = vmatpush2.msra.mxu0 0.0
  %1694 = vmatprep.subr.mxu0 0.0
  %1695 = vmatpush2.msra.mxu0 0.0
  %1696 = vmatprep.subr.mxu0 0.0
  %1697 = vmatpush2.msra.mxu0 0.0
  %1698 = vmatprep.subr.mxu0 0.0
  %1699 = vmatpush2.msra.mxu0 0.0
  %1700 = vmatprep.mubr.f32.mxu0 0.0
  %1701 = vmatmul.mubr.f32.gmra.mxu0 %v1634
  %v1702 = vpop.f32.mrf.mxu0
  %v1703 = vadd.f32 0.0, %v1702
  %v1704 = vpop.f32.mrf.mxu0
  %1705 = vdwg.mxu0
  %v1706 = vadd.f32 %v1630, %v1703
  %v1707 = vmul.f32 %v1706, %v211
  %v1708 = vtanh.pop %v1707
  %v1709 = vmul.f32 %v1708, %v211
  %v1710 = vadd.f32 %v1709, %v212
  %v1711 = vmul.f32 %v1710, %v1456
  %1713 = vrot.lane.b32.xlu0 %v1710, 64
  %v1714 = vpop.permute.xlu0 %1713
  %v1716 = vmul.f32 %v1710, %v1714
  %1718 = vrot.lane.b32.xlu0 %v1716, 32
  %v1719 = vpop.permute.xlu0 %1718
  %v1721 = vadd.f32 %v1711, %v1719
  %v1722 = vtanh.pop %v1721
  %1724 = vrot.lane.b32.xlu0 %v1722, 64
  %v1725 = vpop.permute.xlu0 %1724
  %v1727 = vmul.f32 %v1710, %v1725
  %1729 = vrot.lane.b32.xlu0 %v1629, 32
  %v1730 = vpop.permute.xlu0 %1729
  %v1731 = vsel %vm214, %v1730, 0
  %1733 = vmatprep.subr.mxu0 0.0
  %1734 = vmatpush1.msra.mxu0 0.0
  %1735 = vmatprep.subr.mxu0 0.0
  %1736 = vmatpush1.msra.mxu0 0.0
  %1737 = vmatprep.subr.mxu0 0.0
  %1738 = vmatpush1.msra.mxu0 0.0
  %1739 = vmatprep.subr.mxu0 0.0
  %1740 = vmatpush1.msra.mxu0 0.0
  %1741 = vmatprep.subr.mxu0 0.0
  %1742 = vmatpush1.msra.mxu0 0.0
  %1743 = vmatprep.subr.mxu0 0.0
  %1744 = vmatpush1.msra.mxu0 0.0
  %1745 = vmatprep.subr.mxu0 0.0
  %1746 = vmatpush1.msra.mxu0 0.0
  %1747 = vmatprep.subr.mxu0 0.0
  %1748 = vmatpush1.msra.mxu0 0.0
  %1749 = vmatprep.subr.mxu0 0.0
  %1750 = vmatpush1.msra.mxu0 0.0
  %1751 = vmatprep.subr.mxu0 0.0
  %1752 = vmatpush1.msra.mxu0 0.0
  %1753 = vmatprep.subr.mxu0 0.0
  %1754 = vmatpush1.msra.mxu0 0.0
  %1755 = vmatprep.subr.mxu0 0.0
  %1756 = vmatpush1.msra.mxu0 0.0
  %1757 = vmatprep.subr.mxu0 0.0
  %1758 = vmatpush1.msra.mxu0 %v198
  %1759 = vmatprep.subr.mxu0 0.0
  %1760 = vmatpush1.msra.mxu0 %v197
  %1761 = vmatprep.subr.mxu0 0.0
  %1762 = vmatpush1.msra.mxu0 %v196
  %1763 = vmatprep.subr.mxu0 0.0
  %1764 = vmatpush1.msra.mxu0 %v195
  %1765 = vmatprep.subr.mxu0 0.0
  %1766 = vmatpush2.msra.mxu0 0.0
  %1767 = vmatprep.subr.mxu0 0.0
  %1768 = vmatpush2.msra.mxu0 0.0
  %1769 = vmatprep.subr.mxu0 0.0
  %1770 = vmatpush2.msra.mxu0 0.0
  %1771 = vmatprep.subr.mxu0 0.0
  %1772 = vmatpush2.msra.mxu0 0.0
  %1773 = vmatprep.subr.mxu0 0.0
  %1774 = vmatpush2.msra.mxu0 0.0
  %1775 = vmatprep.subr.mxu0 0.0
  %1776 = vmatpush2.msra.mxu0 0.0
  %1777 = vmatprep.subr.mxu0 0.0
  %1778 = vmatpush2.msra.mxu0 0.0
  %1779 = vmatprep.subr.mxu0 0.0
  %1780 = vmatpush2.msra.mxu0 0.0
  %1781 = vmatprep.subr.mxu0 0.0
  %1782 = vmatpush2.msra.mxu0 0.0
  %1783 = vmatprep.subr.mxu0 0.0
  %1784 = vmatpush2.msra.mxu0 0.0
  %1785 = vmatprep.subr.mxu0 0.0
  %1786 = vmatpush2.msra.mxu0 0.0
  %1787 = vmatprep.subr.mxu0 0.0
  %1788 = vmatpush2.msra.mxu0 0.0
  %1789 = vmatprep.subr.mxu0 0.0
  %1790 = vmatpush2.msra.mxu0 0.0
  %1791 = vmatprep.subr.mxu0 0.0
  %1792 = vmatpush2.msra.mxu0 0.0
  %1793 = vmatprep.subr.mxu0 0.0
  %1794 = vmatpush2.msra.mxu0 0.0
  %1795 = vmatprep.subr.mxu0 0.0
  %1796 = vmatpush2.msra.mxu0 0.0
  %1797 = vmatprep.mubr.f32.mxu0 0.0
  %1798 = vmatmul.mubr.f32.gmra.mxu0 %v1731
  %v1799 = vpop.f32.mrf.mxu0
  %v1800 = vadd.f32 0.0, %v1799
  %v1801 = vpop.f32.mrf.mxu0
  %1802 = vdwg.mxu0
  %1803 = vmatprep.subr.mxu0 0.0
  %1804 = vmatpush1.msra.mxu0 0.0
  %1805 = vmatprep.subr.mxu0 0.0
  %1806 = vmatpush1.msra.mxu0 0.0
  %1807 = vmatprep.subr.mxu0 0.0
  %1808 = vmatpush1.msra.mxu0 0.0
  %1809 = vmatprep.subr.mxu0 0.0
  %1810 = vmatpush1.msra.mxu0 0.0
  %1811 = vmatprep.subr.mxu0 0.0
  %1812 = vmatpush1.msra.mxu0 0.0
  %1813 = vmatprep.subr.mxu0 0.0
  %1814 = vmatpush1.msra.mxu0 0.0
  %1815 = vmatprep.subr.mxu0 0.0
  %1816 = vmatpush1.msra.mxu0 0.0
  %1817 = vmatprep.subr.mxu0 0.0
  %1818 = vmatpush1.msra.mxu0 0.0
  %1819 = vmatprep.subr.mxu0 0.0
  %1820 = vmatpush1.msra.mxu0 0.0
  %1821 = vmatprep.subr.mxu0 0.0
  %1822 = vmatpush1.msra.mxu0 0.0
  %1823 = vmatprep.subr.mxu0 0.0
  %1824 = vmatpush1.msra.mxu0 0.0
  %1825 = vmatprep.subr.mxu0 0.0
  %1826 = vmatpush1.msra.mxu0 0.0
  %1827 = vmatprep.subr.mxu0 0.0
  %1828 = vmatpush1.msra.mxu0 %v194
  %1829 = vmatprep.subr.mxu0 0.0
  %1830 = vmatpush1.msra.mxu0 %v193
  %1831 = vmatprep.subr.mxu0 0.0
  %1832 = vmatpush1.msra.mxu0 %v192
  %1833 = vmatprep.subr.mxu0 0.0
  %1834 = vmatpush1.msra.mxu0 %v191
  %1835 = vmatprep.subr.mxu0 0.0
  %1836 = vmatpush2.msra.mxu0 0.0
  %1837 = vmatprep.subr.mxu0 0.0
  %1838 = vmatpush2.msra.mxu0 0.0
  %1839 = vmatprep.subr.mxu0 0.0
  %1840 = vmatpush2.msra.mxu0 0.0
  %1841 = vmatprep.subr.mxu0 0.0
  %1842 = vmatpush2.msra.mxu0 0.0
  %1843 = vmatprep.subr.mxu0 0.0
  %1844 = vmatpush2.msra.mxu0 0.0
  %1845 = vmatprep.subr.mxu0 0.0
  %1846 = vmatpush2.msra.mxu0 0.0
  %1847 = vmatprep.subr.mxu0 0.0
  %1848 = vmatpush2.msra.mxu0 0.0
  %1849 = vmatprep.subr.mxu0 0.0
  %1850 = vmatpush2.msra.mxu0 0.0
  %1851 = vmatprep.subr.mxu0 0.0
  %1852 = vmatpush2.msra.mxu0 0.0
  %1853 = vmatprep.subr.mxu0 0.0
  %1854 = vmatpush2.msra.mxu0 0.0
  %1855 = vmatprep.subr.mxu0 0.0
  %1856 = vmatpush2.msra.mxu0 0.0
  %1857 = vmatprep.subr.mxu0 0.0
  %1858 = vmatpush2.msra.mxu0 0.0
  %1859 = vmatprep.subr.mxu0 0.0
  %1860 = vmatpush2.msra.mxu0 0.0
  %1861 = vmatprep.subr.mxu0 0.0
  %1862 = vmatpush2.msra.mxu0 0.0
  %1863 = vmatprep.subr.mxu0 0.0
  %1864 = vmatpush2.msra.mxu0 0.0
  %1865 = vmatprep.subr.mxu0 0.0
  %1866 = vmatpush2.msra.mxu0 0.0
  %1867 = vmatprep.mubr.f32.mxu0 0.0
  %1868 = vmatmul.mubr.f32.gmra.mxu0 %v1634
  %v1869 = vpop.f32.mrf.mxu0
  %v1870 = vadd.f32 %v1800, %v1869
  %v1871 = vpop.f32.mrf.mxu0
  %1872 = vdwg.mxu0
  %v1873 = vadd.f32 %v1870, %v204
  %v1874 = vmul.f32 %v1873, %v211
  %v1875 = vtanh.pop %v1874
  %v1876 = vmul.f32 %v1875, %v211
  %v1877 = vadd.f32 %v1876, %v212
  %v1878 = vmul.f32 %v1877, %v1623
  %1880 = vrot.lane.b32.xlu0 %v1877, 64
  %v1881 = vpop.permute.xlu0 %1880
  %v1883 = vmul.f32 %v1877, %v1881
  %1885 = vrot.lane.b32.xlu0 %v1883, 32
  %v1886 = vpop.permute.xlu0 %1885
  %v1888 = vadd.f32 %v1878, %v1886
  %v1889 = vtanh.pop %v1888
  %1891 = vrot.lane.b32.xlu0 %v1889, 64
  %v1892 = vpop.permute.xlu0 %1891
  %v1894 = vmul.f32 %v1877, %v1892
  %v1895 = vld [vmem:[#allocation2 + $0x38] sm:$0xff]
  %1897 = vrot.lane.b32.xlu0 %v1727, 32
  %v1898 = vpop.permute.xlu0 %1897
  %v1899 = vsel %vm214, %v1898, 0
  %1901 = vmatprep.subr.mxu0 0.0
  %1902 = vmatpush1.msra.mxu0 0.0
  %1903 = vmatprep.subr.mxu0 0.0
  %1904 = vmatpush1.msra.mxu0 0.0
  %1905 = vmatprep.subr.mxu0 0.0
  %1906 = vmatpush1.msra.mxu0 0.0
  %1907 = vmatprep.subr.mxu0 0.0
  %1908 = vmatpush1.msra.mxu0 0.0
  %1909 = vmatprep.subr.mxu0 0.0
  %1910 = vmatpush1.msra.mxu0 0.0
  %1911 = vmatprep.subr.mxu0 0.0
  %1912 = vmatpush1.msra.mxu0 0.0
  %1913 = vmatprep.subr.mxu0 0.0
  %1914 = vmatpush1.msra.mxu0 0.0
  %1915 = vmatprep.subr.mxu0 0.0
  %1916 = vmatpush1.msra.mxu0 0.0
  %1917 = vmatprep.subr.mxu0 0.0
  %1918 = vmatpush1.msra.mxu0 0.0
  %1919 = vmatprep.subr.mxu0 0.0
  %1920 = vmatpush1.msra.mxu0 0.0
  %1921 = vmatprep.subr.mxu0 0.0
  %1922 = vmatpush1.msra.mxu0 0.0
  %1923 = vmatprep.subr.mxu0 0.0
  %1924 = vmatpush1.msra.mxu0 0.0
  %1925 = vmatprep.subr.mxu0 0.0
  %1926 = vmatpush1.msra.mxu0 %v190
  %1927 = vmatprep.subr.mxu0 0.0
  %1928 = vmatpush1.msra.mxu0 %v189
  %1929 = vmatprep.subr.mxu0 0.0
  %1930 = vmatpush1.msra.mxu0 %v188
  %1931 = vmatprep.subr.mxu0 0.0
  %1932 = vmatpush1.msra.mxu0 %v187
  %1933 = vmatprep.subr.mxu0 0.0
  %1934 = vmatpush2.msra.mxu0 0.0
  %1935 = vmatprep.subr.mxu0 0.0
  %1936 = vmatpush2.msra.mxu0 0.0
  %1937 = vmatprep.subr.mxu0 0.0
  %1938 = vmatpush2.msra.mxu0 0.0
  %1939 = vmatprep.subr.mxu0 0.0
  %1940 = vmatpush2.msra.mxu0 0.0
  %1941 = vmatprep.subr.mxu0 0.0
  %1942 = vmatpush2.msra.mxu0 0.0
  %1943 = vmatprep.subr.mxu0 0.0
  %1944 = vmatpush2.msra.mxu0 0.0
  %1945 = vmatprep.subr.mxu0 0.0
  %1946 = vmatpush2.msra.mxu0 0.0
  %1947 = vmatprep.subr.mxu0 0.0
  %1948 = vmatpush2.msra.mxu0 0.0
  %1949 = vmatprep.subr.mxu0 0.0
  %1950 = vmatpush2.msra.mxu0 0.0
  %1951 = vmatprep.subr.mxu0 0.0
  %1952 = vmatpush2.msra.mxu0 0.0
  %1953 = vmatprep.subr.mxu0 0.0
  %1954 = vmatpush2.msra.mxu0 0.0
  %1955 = vmatprep.subr.mxu0 0.0
  %1956 = vmatpush2.msra.mxu0 0.0
  %1957 = vmatprep.subr.mxu0 0.0
  %1958 = vmatpush2.msra.mxu0 0.0
  %1959 = vmatprep.subr.mxu0 0.0
  %1960 = vmatpush2.msra.mxu0 0.0
  %1961 = vmatprep.subr.mxu0 0.0
  %1962 = vmatpush2.msra.mxu0 0.0
  %1963 = vmatprep.subr.mxu0 0.0
  %1964 = vmatpush2.msra.mxu0 0.0
  %1965 = vmatprep.mubr.f32.mxu0 0.0
  %1966 = vmatmul.mubr.f32.gmra.mxu0 %v1899
  %v1967 = vpop.f32.mrf.mxu0
  %v1968 = vadd.f32 0.0, %v1967
  %v1969 = vpop.f32.mrf.mxu0
  %1970 = vdwg.mxu0
  %v1971 = vadd.f32 %v1895, %v1968
  %v1972 = vmul.f32 %v1971, %v211
  %v1973 = vtanh.pop %v1972
  %v1974 = vmul.f32 %v1973, %v211
  %v1975 = vadd.f32 %v1974, %v212
  %v1976 = vmul.f32 %v1975, %v1721
  %1978 = vrot.lane.b32.xlu0 %v1975, 64
  %v1979 = vpop.permute.xlu0 %1978
  %v1981 = vmul.f32 %v1975, %v1979
  %1983 = vrot.lane.b32.xlu0 %v1981, 32
  %v1984 = vpop.permute.xlu0 %1983
  %v1986 = vadd.f32 %v1976, %v1984
  %v1987 = vtanh.pop %v1986
  %1989 = vrot.lane.b32.xlu0 %v1987, 64
  %v1990 = vpop.permute.xlu0 %1989
  %v1992 = vmul.f32 %v1975, %v1990
  %1994 = vrot.lane.b32.xlu0 %v1894, 32
  %v1995 = vpop.permute.xlu0 %1994
  %v1996 = vsel %vm214, %v1995, 0
  %1998 = vmatprep.subr.mxu0 0.0
  %1999 = vmatpush1.msra.mxu0 0.0
  %2000 = vmatprep.subr.mxu0 0.0
  %2001 = vmatpush1.msra.mxu0 0.0
  %2002 = vmatprep.subr.mxu0 0.0
  %2003 = vmatpush1.msra.mxu0 0.0
  %2004 = vmatprep.subr.mxu0 0.0
  %2005 = vmatpush1.msra.mxu0 0.0
  %2006 = vmatprep.subr.mxu0 0.0
  %2007 = vmatpush1.msra.mxu0 0.0
  %2008 = vmatprep.subr.mxu0 0.0
  %2009 = vmatpush1.msra.mxu0 0.0
  %2010 = vmatprep.subr.mxu0 0.0
  %2011 = vmatpush1.msra.mxu0 0.0
  %2012 = vmatprep.subr.mxu0 0.0
  %2013 = vmatpush1.msra.mxu0 0.0
  %2014 = vmatprep.subr.mxu0 0.0
  %2015 = vmatpush1.msra.mxu0 0.0
  %2016 = vmatprep.subr.mxu0 0.0
  %2017 = vmatpush1.msra.mxu0 0.0
  %2018 = vmatprep.subr.mxu0 0.0
  %2019 = vmatpush1.msra.mxu0 0.0
  %2020 = vmatprep.subr.mxu0 0.0
  %2021 = vmatpush1.msra.mxu0 0.0
  %2022 = vmatprep.subr.mxu0 0.0
  %2023 = vmatpush1.msra.mxu0 %v198
  %2024 = vmatprep.subr.mxu0 0.0
  %2025 = vmatpush1.msra.mxu0 %v197
  %2026 = vmatprep.subr.mxu0 0.0
  %2027 = vmatpush1.msra.mxu0 %v196
  %2028 = vmatprep.subr.mxu0 0.0
  %2029 = vmatpush1.msra.mxu0 %v195
  %2030 = vmatprep.subr.mxu0 0.0
  %2031 = vmatpush2.msra.mxu0 0.0
  %2032 = vmatprep.subr.mxu0 0.0
  %2033 = vmatpush2.msra.mxu0 0.0
  %2034 = vmatprep.subr.mxu0 0.0
  %2035 = vmatpush2.msra.mxu0 0.0
  %2036 = vmatprep.subr.mxu0 0.0
  %2037 = vmatpush2.msra.mxu0 0.0
  %2038 = vmatprep.subr.mxu0 0.0
  %2039 = vmatpush2.msra.mxu0 0.0
  %2040 = vmatprep.subr.mxu0 0.0
  %2041 = vmatpush2.msra.mxu0 0.0
  %2042 = vmatprep.subr.mxu0 0.0
  %2043 = vmatpush2.msra.mxu0 0.0
  %2044 = vmatprep.subr.mxu0 0.0
  %2045 = vmatpush2.msra.mxu0 0.0
  %2046 = vmatprep.subr.mxu0 0.0
  %2047 = vmatpush2.msra.mxu0 0.0
  %2048 = vmatprep.subr.mxu0 0.0
  %2049 = vmatpush2.msra.mxu0 0.0
  %2050 = vmatprep.subr.mxu0 0.0
  %2051 = vmatpush2.msra.mxu0 0.0
  %2052 = vmatprep.subr.mxu0 0.0
  %2053 = vmatpush2.msra.mxu0 0.0
  %2054 = vmatprep.subr.mxu0 0.0
  %2055 = vmatpush2.msra.mxu0 0.0
  %2056 = vmatprep.subr.mxu0 0.0
  %2057 = vmatpush2.msra.mxu0 0.0
  %2058 = vmatprep.subr.mxu0 0.0
  %2059 = vmatpush2.msra.mxu0 0.0
  %2060 = vmatprep.subr.mxu0 0.0
  %2061 = vmatpush2.msra.mxu0 0.0
  %2062 = vmatprep.mubr.f32.mxu0 0.0
  %2063 = vmatmul.mubr.f32.gmra.mxu0 %v1996
  %v2064 = vpop.f32.mrf.mxu0
  %v2065 = vadd.f32 0.0, %v2064
  %v2066 = vpop.f32.mrf.mxu0
  %2067 = vdwg.mxu0
  %2068 = vmatprep.subr.mxu0 0.0
  %2069 = vmatpush1.msra.mxu0 0.0
  %2070 = vmatprep.subr.mxu0 0.0
  %2071 = vmatpush1.msra.mxu0 0.0
  %2072 = vmatprep.subr.mxu0 0.0
  %2073 = vmatpush1.msra.mxu0 0.0
  %2074 = vmatprep.subr.mxu0 0.0
  %2075 = vmatpush1.msra.mxu0 0.0
  %2076 = vmatprep.subr.mxu0 0.0
  %2077 = vmatpush1.msra.mxu0 0.0
  %2078 = vmatprep.subr.mxu0 0.0
  %2079 = vmatpush1.msra.mxu0 0.0
  %2080 = vmatprep.subr.mxu0 0.0
  %2081 = vmatpush1.msra.mxu0 0.0
  %2082 = vmatprep.subr.mxu0 0.0
  %2083 = vmatpush1.msra.mxu0 0.0
  %2084 = vmatprep.subr.mxu0 0.0
  %2085 = vmatpush1.msra.mxu0 0.0
  %2086 = vmatprep.subr.mxu0 0.0
  %2087 = vmatpush1.msra.mxu0 0.0
  %2088 = vmatprep.subr.mxu0 0.0
  %2089 = vmatpush1.msra.mxu0 0.0
  %2090 = vmatprep.subr.mxu0 0.0
  %2091 = vmatpush1.msra.mxu0 0.0
  %2092 = vmatprep.subr.mxu0 0.0
  %2093 = vmatpush1.msra.mxu0 %v194
  %2094 = vmatprep.subr.mxu0 0.0
  %2095 = vmatpush1.msra.mxu0 %v193
  %2096 = vmatprep.subr.mxu0 0.0
  %2097 = vmatpush1.msra.mxu0 %v192
  %2098 = vmatprep.subr.mxu0 0.0
  %2099 = vmatpush1.msra.mxu0 %v191
  %2100 = vmatprep.subr.mxu0 0.0
  %2101 = vmatpush2.msra.mxu0 0.0
  %2102 = vmatprep.subr.mxu0 0.0
  %2103 = vmatpush2.msra.mxu0 0.0
  %2104 = vmatprep.subr.mxu0 0.0
  %2105 = vmatpush2.msra.mxu0 0.0
  %2106 = vmatprep.subr.mxu0 0.0
  %2107 = vmatpush2.msra.mxu0 0.0
  %2108 = vmatprep.subr.mxu0 0.0
  %2109 = vmatpush2.msra.mxu0 0.0
  %2110 = vmatprep.subr.mxu0 0.0
  %2111 = vmatpush2.msra.mxu0 0.0
  %2112 = vmatprep.subr.mxu0 0.0
  %2113 = vmatpush2.msra.mxu0 0.0
  %2114 = vmatprep.subr.mxu0 0.0
  %2115 = vmatpush2.msra.mxu0 0.0
  %2116 = vmatprep.subr.mxu0 0.0
  %2117 = vmatpush2.msra.mxu0 0.0
  %2118 = vmatprep.subr.mxu0 0.0
  %2119 = vmatpush2.msra.mxu0 0.0
  %2120 = vmatprep.subr.mxu0 0.0
  %2121 = vmatpush2.msra.mxu0 0.0
  %2122 = vmatprep.subr.mxu0 0.0
  %2123 = vmatpush2.msra.mxu0 0.0
  %2124 = vmatprep.subr.mxu0 0.0
  %2125 = vmatpush2.msra.mxu0 0.0
  %2126 = vmatprep.subr.mxu0 0.0
  %2127 = vmatpush2.msra.mxu0 0.0
  %2128 = vmatprep.subr.mxu0 0.0
  %2129 = vmatpush2.msra.mxu0 0.0
  %2130 = vmatprep.subr.mxu0 0.0
  %2131 = vmatpush2.msra.mxu0 0.0
  %2132 = vmatprep.mubr.f32.mxu0 0.0
  %2133 = vmatmul.mubr.f32.gmra.mxu0 %v1899
  %v2134 = vpop.f32.mrf.mxu0
  %v2135 = vadd.f32 %v2065, %v2134
  %v2136 = vpop.f32.mrf.mxu0
  %2137 = vdwg.mxu0
  %v2138 = vadd.f32 %v2135, %v204
  %v2139 = vmul.f32 %v2138, %v211
  %v2140 = vtanh.pop %v2139
  %v2141 = vmul.f32 %v2140, %v211
  %v2142 = vadd.f32 %v2141, %v212
  %v2143 = vmul.f32 %v2142, %v1888
  %2145 = vrot.lane.b32.xlu0 %v2142, 64
  %v2146 = vpop.permute.xlu0 %2145
  %v2148 = vmul.f32 %v2142, %v2146
  %2150 = vrot.lane.b32.xlu0 %v2148, 32
  %v2151 = vpop.permute.xlu0 %2150
  %v2153 = vadd.f32 %v2143, %v2151
  %v2154 = vtanh.pop %v2153
  %2156 = vrot.lane.b32.xlu0 %v2154, 64
  %v2157 = vpop.permute.xlu0 %2156
  %v2159 = vmul.f32 %v2142, %v2157
  %2161 = vrot.lane.b32.xlu0 %v2159, 32
  %v2162 = vpop.permute.xlu0 %2161
  %v2163 = vsel %vm214, %v2162, 0
  %2165 = vmatprep.subr.mxu0 0.0
  %2166 = vmatpush1.msra.mxu0 0.0
  %2167 = vmatprep.subr.mxu0 0.0
  %2168 = vmatpush1.msra.mxu0 0.0
  %2169 = vmatprep.subr.mxu0 0.0
  %2170 = vmatpush1.msra.mxu0 0.0
  %2171 = vmatprep.subr.mxu0 0.0
  %2172 = vmatpush1.msra.mxu0 0.0
  %2173 = vmatprep.subr.mxu0 0.0
  %2174 = vmatpush1.msra.mxu0 0.0
  %2175 = vmatprep.subr.mxu0 0.0
  %2176 = vmatpush1.msra.mxu0 0.0
  %2177 = vmatprep.subr.mxu0 0.0
  %2178 = vmatpush1.msra.mxu0 0.0
  %2179 = vmatprep.subr.mxu0 0.0
  %2180 = vmatpush1.msra.mxu0 0.0
  %2181 = vmatprep.subr.mxu0 0.0
  %2182 = vmatpush1.msra.mxu0 0.0
  %2183 = vmatprep.subr.mxu0 0.0
  %2184 = vmatpush1.msra.mxu0 0.0
  %2185 = vmatprep.subr.mxu0 0.0
  %2186 = vmatpush1.msra.mxu0 0.0
  %2187 = vmatprep.subr.mxu0 0.0
  %2188 = vmatpush1.msra.mxu0 0.0
  %2189 = vmatprep.subr.mxu0 0.0
  %2190 = vmatpush1.msra.mxu0 %v198
  %2191 = vmatprep.subr.mxu0 0.0
  %2192 = vmatpush1.msra.mxu0 %v197
  %2193 = vmatprep.subr.mxu0 0.0
  %2194 = vmatpush1.msra.mxu0 %v196
  %2195 = vmatprep.subr.mxu0 0.0
  %2196 = vmatpush1.msra.mxu0 %v195
  %2197 = vmatprep.subr.mxu0 0.0
  %2198 = vmatpush2.msra.mxu0 0.0
  %2199 = vmatprep.subr.mxu0 0.0
  %2200 = vmatpush2.msra.mxu0 0.0
  %2201 = vmatprep.subr.mxu0 0.0
  %2202 = vmatpush2.msra.mxu0 0.0
  %2203 = vmatprep.subr.mxu0 0.0
  %2204 = vmatpush2.msra.mxu0 0.0
  %2205 = vmatprep.subr.mxu0 0.0
  %2206 = vmatpush2.msra.mxu0 0.0
  %2207 = vmatprep.subr.mxu0 0.0
  %2208 = vmatpush2.msra.mxu0 0.0
  %2209 = vmatprep.subr.mxu0 0.0
  %2210 = vmatpush2.msra.mxu0 0.0
  %2211 = vmatprep.subr.mxu0 0.0
  %2212 = vmatpush2.msra.mxu0 0.0
  %2213 = vmatprep.subr.mxu0 0.0
  %2214 = vmatpush2.msra.mxu0 0.0
  %2215 = vmatprep.subr.mxu0 0.0
  %2216 = vmatpush2.msra.mxu0 0.0
  %2217 = vmatprep.subr.mxu0 0.0
  %2218 = vmatpush2.msra.mxu0 0.0
  %2219 = vmatprep.subr.mxu0 0.0
  %2220 = vmatpush2.msra.mxu0 0.0
  %2221 = vmatprep.subr.mxu0 0.0
  %2222 = vmatpush2.msra.mxu0 0.0
  %2223 = vmatprep.subr.mxu0 0.0
  %2224 = vmatpush2.msra.mxu0 0.0
  %2225 = vmatprep.subr.mxu0 0.0
  %2226 = vmatpush2.msra.mxu0 0.0
  %2227 = vmatprep.subr.mxu0 0.0
  %2228 = vmatpush2.msra.mxu0 0.0
  %2229 = vmatprep.mubr.f32.mxu0 0.0
  %2230 = vmatmul.mubr.f32.gmra.mxu0 %v2163
  %v2231 = vpop.f32.mrf.mxu0
  %v2232 = vadd.f32 0.0, %v2231
  %v2233 = vpop.f32.mrf.mxu0
  %2234 = vdwg.mxu0
  %2236 = vrot.lane.b32.xlu0 %v1992, 32
  %v2237 = vpop.permute.xlu0 %2236
  %v2238 = vsel %vm214, %v2237, 0
  %2240 = vmatprep.subr.mxu0 0.0
  %2241 = vmatpush1.msra.mxu0 0.0
  %2242 = vmatprep.subr.mxu0 0.0
  %2243 = vmatpush1.msra.mxu0 0.0
  %2244 = vmatprep.subr.mxu0 0.0
  %2245 = vmatpush1.msra.mxu0 0.0
  %2246 = vmatprep.subr.mxu0 0.0
  %2247 = vmatpush1.msra.mxu0 0.0
  %2248 = vmatprep.subr.mxu0 0.0
  %2249 = vmatpush1.msra.mxu0 0.0
  %2250 = vmatprep.subr.mxu0 0.0
  %2251 = vmatpush1.msra.mxu0 0.0
  %2252 = vmatprep.subr.mxu0 0.0
  %2253 = vmatpush1.msra.mxu0 0.0
  %2254 = vmatprep.subr.mxu0 0.0
  %2255 = vmatpush1.msra.mxu0 0.0
  %2256 = vmatprep.subr.mxu0 0.0
  %2257 = vmatpush1.msra.mxu0 0.0
  %2258 = vmatprep.subr.mxu0 0.0
  %2259 = vmatpush1.msra.mxu0 0.0
  %2260 = vmatprep.subr.mxu0 0.0
  %2261 = vmatpush1.msra.mxu0 0.0
  %2262 = vmatprep.subr.mxu0 0.0
  %2263 = vmatpush1.msra.mxu0 0.0
  %2264 = vmatprep.subr.mxu0 0.0
  %2265 = vmatpush1.msra.mxu0 %v194
  %2266 = vmatprep.subr.mxu0 0.0
  %2267 = vmatpush1.msra.mxu0 %v193
  %2268 = vmatprep.subr.mxu0 0.0
  %2269 = vmatpush1.msra.mxu0 %v192
  %2270 = vmatprep.subr.mxu0 0.0
  %2271 = vmatpush1.msra.mxu0 %v191
  %2272 = vmatprep.subr.mxu0 0.0
  %2273 = vmatpush2.msra.mxu0 0.0
  %2274 = vmatprep.subr.mxu0 0.0
  %2275 = vmatpush2.msra.mxu0 0.0
  %2276 = vmatprep.subr.mxu0 0.0
  %2277 = vmatpush2.msra.mxu0 0.0
  %2278 = vmatprep.subr.mxu0 0.0
  %2279 = vmatpush2.msra.mxu0 0.0
  %2280 = vmatprep.subr.mxu0 0.0
  %2281 = vmatpush2.msra.mxu0 0.0
  %2282 = vmatprep.subr.mxu0 0.0
  %2283 = vmatpush2.msra.mxu0 0.0
  %2284 = vmatprep.subr.mxu0 0.0
  %2285 = vmatpush2.msra.mxu0 0.0
  %2286 = vmatprep.subr.mxu0 0.0
  %2287 = vmatpush2.msra.mxu0 0.0
  %2288 = vmatprep.subr.mxu0 0.0
  %2289 = vmatpush2.msra.mxu0 0.0
  %2290 = vmatprep.subr.mxu0 0.0
  %2291 = vmatpush2.msra.mxu0 0.0
  %2292 = vmatprep.subr.mxu0 0.0
  %2293 = vmatpush2.msra.mxu0 0.0
  %2294 = vmatprep.subr.mxu0 0.0
  %2295 = vmatpush2.msra.mxu0 0.0
  %2296 = vmatprep.subr.mxu0 0.0
  %2297 = vmatpush2.msra.mxu0 0.0
  %2298 = vmatprep.subr.mxu0 0.0
  %2299 = vmatpush2.msra.mxu0 0.0
  %2300 = vmatprep.subr.mxu0 0.0
  %2301 = vmatpush2.msra.mxu0 0.0
  %2302 = vmatprep.subr.mxu0 0.0
  %2303 = vmatpush2.msra.mxu0 0.0
  %2304 = vmatprep.mubr.f32.mxu0 0.0
  %2305 = vmatmul.mubr.f32.gmra.mxu0 %v2238
  %v2306 = vpop.f32.mrf.mxu0
  %v2307 = vadd.f32 %v2232, %v2306
  %v2308 = vpop.f32.mrf.mxu0
  %2309 = vdwg.mxu0
  %v2310 = vadd.f32 %v2307, %v204
  %v2311 = vmul.f32 %v2310, %v211
  %v2312 = vtanh.pop %v2311
  %v2313 = vmul.f32 %v2312, %v211
  %v2314 = vadd.f32 %v2313, %v212
  %v2315 = vmul.f32 %v2314, %v2153
  %2317 = vrot.lane.b32.xlu0 %v2314, 64
  %v2318 = vpop.permute.xlu0 %2317
  %v2320 = vmul.f32 %v2314, %v2318
  %2322 = vrot.lane.b32.xlu0 %v2320, 32
  %v2323 = vpop.permute.xlu0 %2322
  %v2325 = vadd.f32 %v2315, %v2323
  %v2326 = vtanh.pop %v2325
  %2328 = vrot.lane.b32.xlu0 %v2326, 64
  %v2329 = vpop.permute.xlu0 %2328
  %v2331 = vmul.f32 %v2314, %v2329
  %v2332 = vld [vmem:[%s7] sm:$0xff]
  %v2333 = vld [vmem:[%s7 + $0x8] sm:$0xff]
  %v2334 = vld [vmem:[%s7 + $0x10] sm:$0xff]
  %v2335 = vld [vmem:[%s7 + $0x18] sm:$0xff]
  %v2336 = vld [vmem:[%s8] sm:$0x1]
  %v2338 = vlaneseq
  %v2339 = vshrl.u32 %v2338, 7
  %v2340 = vsub.s32 0, %v2339
  %v2341 = vrot.slane %v2336, %v2340
  %2344 = vrot.lane.b32.xlu0 %v2331, 32
  %v2345 = vpop.permute.xlu0 %2344
  %v2346 = vsel %vm214, %v2345, 0
  %2348 = vmatprep.subr.mxu0 0.0
  %2349 = vmatpush1.msra.mxu0 0.0
  %2350 = vmatprep.subr.mxu0 0.0
  %2351 = vmatpush1.msra.mxu0 0.0
  %2352 = vmatprep.subr.mxu0 0.0
  %2353 = vmatpush1.msra.mxu0 0.0
  %2354 = vmatprep.subr.mxu0 0.0
  %2355 = vmatpush1.msra.mxu0 0.0
  %2356 = vmatprep.subr.mxu0 0.0
  %2357 = vmatpush1.msra.mxu0 0.0
  %2358 = vmatprep.subr.mxu0 0.0
  %2359 = vmatpush1.msra.mxu0 0.0
  %2360 = vmatprep.subr.mxu0 0.0
  %2361 = vmatpush1.msra.mxu0 0.0
  %2362 = vmatprep.subr.mxu0 0.0
  %2363 = vmatpush1.msra.mxu0 0.0
  %2364 = vmatprep.subr.mxu0 0.0
  %2365 = vmatpush1.msra.mxu0 0.0
  %2366 = vmatprep.subr.mxu0 0.0
  %2367 = vmatpush1.msra.mxu0 0.0
  %2368 = vmatprep.subr.mxu0 0.0
  %2369 = vmatpush1.msra.mxu0 0.0
  %2370 = vmatprep.subr.mxu0 0.0
  %2371 = vmatpush1.msra.mxu0 0.0
  %2372 = vmatprep.subr.mxu0 0.0
  %2373 = vmatpush1.msra.mxu0 %v2335
  %2374 = vmatprep.subr.mxu0 0.0
  %2375 = vmatpush1.msra.mxu0 %v2334
  %2376 = vmatprep.subr.mxu0 0.0
  %2377 = vmatpush1.msra.mxu0 %v2333
  %2378 = vmatprep.subr.mxu0 0.0
  %2379 = vmatpush1.msra.mxu0 %v2332
  %2380 = vmatprep.subr.mxu0 0.0
  %2381 = vmatpush2.msra.mxu0 0.0
  %2382 = vmatprep.subr.mxu0 0.0
  %2383 = vmatpush2.msra.mxu0 0.0
  %2384 = vmatprep.subr.mxu0 0.0
  %2385 = vmatpush2.msra.mxu0 0.0
  %2386 = vmatprep.subr.mxu0 0.0
  %2387 = vmatpush2.msra.mxu0 0.0
  %2388 = vmatprep.subr.mxu0 0.0
  %2389 = vmatpush2.msra.mxu0 0.0
  %2390 = vmatprep.subr.mxu0 0.0
  %2391 = vmatpush2.msra.mxu0 0.0
  %2392 = vmatprep.subr.mxu0 0.0
  %2393 = vmatpush2.msra.mxu0 0.0
  %2394 = vmatprep.subr.mxu0 0.0
  %2395 = vmatpush2.msra.mxu0 0.0
  %2396 = vmatprep.subr.mxu0 0.0
  %2397 = vmatpush2.msra.mxu0 0.0
  %2398 = vmatprep.subr.mxu0 0.0
  %2399 = vmatpush2.msra.mxu0 0.0
  %2400 = vmatprep.subr.mxu0 0.0
  %2401 = vmatpush2.msra.mxu0 0.0
  %2402 = vmatprep.subr.mxu0 0.0
  %2403 = vmatpush2.msra.mxu0 0.0
  %2404 = vmatprep.subr.mxu0 0.0
  %2405 = vmatpush2.msra.mxu0 0.0
  %2406 = vmatprep.subr.mxu0 0.0
  %2407 = vmatpush2.msra.mxu0 0.0
  %2408 = vmatprep.subr.mxu0 0.0
  %2409 = vmatpush2.msra.mxu0 0.0
  %2410 = vmatprep.subr.mxu0 0.0
  %2411 = vmatpush2.msra.mxu0 0.0
  %2412 = vmatprep.mubr.f32.mxu0 0.0
  %2413 = vmatmul.mubr.f32.gmra.mxu0 %v2346
  %v2414 = vpop.f32.mrf.mxu0
  %v2415 = vadd.f32 %v2341, %v2414
  %v2416 = vpop.f32.mrf.mxu0
  %2417 = vdwg.mxu0
  %2418 = vst [vmem:[%s9] sm:$0xff] %v2415
  // Predicated region
  $region38: #{_forward_impl.1} parent=0 // pred_check
    _
  $region39: #{_forward_impl.1} parent=0 // pred_check_branch
    %2420 = sbr.rel (0) target = $region41
  $region40: #{_forward_impl.1} parent=0 // pred_region
    _
  $region41: #{_forward_impl.1} parent=0 // pred_fallthru
    _
  // Predicated region
  $region42: #{_forward_impl.1} parent=0 // pred_check
    _
  $region43: #{_forward_impl.1} parent=0 // pred_check_branch
    %2422 = sbr.rel (0) target = $region45
  $region44: #{_forward_impl.1} parent=0 // pred_region
    _
  $region45: #{_forward_impl.1} parent=0 // pred_fallthru
    _

</llo_original>
